<compile_context>
chip_gen: v5e
topology: v5e:2x2
jax: 0.10.0
libtpu: 0.0.40
codegen_flags: <defaults>
</compile_context>

<pallas_src>
import functools
import numpy as np
import jax
import jax.numpy as jnp
from jax.experimental import pallas as pl
from jax.experimental.pallas import tpu as pltpu


# ---------------------------------------------------------------------------
# Bicubic interpolation matrices (pytorch_half_pixel, cubic_coeff_a = -0.75)
# ---------------------------------------------------------------------------
def _cubic_weight(x, a=-0.75):
    x = abs(float(x))
    if x <= 1.0:
        return ((a + 2.0) * x - (a + 3.0)) * x * x + 1.0
    if x < 2.0:
        return (((x - 5.0) * x + 8.0) * x - 4.0) * a
    return 0.0


def bicubic_matrix(in_size, out_size):
    """(out_size, in_size) matrix so that out = A @ in matches torch bicubic
    (align_corners=False, border-clamped taps)."""
    # TODO(synk): for non-integer scale factors torch may use the raw scale
    # (not out/in) in the coordinate transform; exact integer scales match.
    A = np.zeros((out_size, in_size), dtype=np.float32)
    scale = in_size / out_size
    for i in range(out_size):
        src = (i + 0.5) * scale - 0.5
        x0 = int(np.floor(src))
        t = src - x0
        for k in range(-1, 3):
            idx = min(max(x0 + k, 0), in_size - 1)
            A[i, idx] += _cubic_weight(k - t)
    return A


def _build_interp_matrices(H, W, Hout, Wout, th1, T, th_in, Wp, P1, P3):
    """Row-tiled height matrix (halo + zero padding rows baked in) and a
    zero-padded, lane-aligned transposed width matrix."""
    Ah = bicubic_matrix(H, Hout)                       # (Hout, H)
    Aw = bicubic_matrix(W, Wout)                       # (Wout, W)
    ah_t = np.zeros((T, th_in, H), np.float32)
    for t in range(T):
        for p in range(th_in):
            u = t * th1 + p - (P1 + P3)                # upsampled row of this padded row
            if 0 <= u < Hout:
                ah_t[t, p, :] = Ah[u]
    awt = np.zeros((W, Wp), np.float32)                # zero cols = pad + lane gutter
    awt[:, P1:P1 + Wout] = Aw.T
    return jnp.asarray(ah_t), jnp.asarray(awt)


# ---------------------------------------------------------------------------
# Kernel 1: bicubic upsample of one row tile -> bf16 flattened padded tile.
#   x_ref  : (1, C, H, W) f32   (whole low-res image, small)
#   ah_ref : (1, th_in, H) f32  (zero rows = conv1 padding / conv3 halo)
#   awt_ref: (W, Wp) f32        (zero cols = conv1 padding / 128-lane gutter)
#   o_ref  : (1, 1, C, th_in*Wp) bf16
# ---------------------------------------------------------------------------
def _interp_kernel(x_ref, ah_ref, awt_ref, o_ref, *, C):
    ah = ah_ref[0]                                     # (th_in, H)
    awt = awt_ref[...]                                 # (W, Wp)
    th_in = ah.shape[0]
    Wp = awt.shape[1]
    for c in range(C):
        xw = jnp.dot(x_ref[0, c], awt, preferred_element_type=jnp.float32)   # (H, Wp)
        yc = jnp.dot(ah, xw, preferred_element_type=jnp.float32)             # (th_in, Wp)
        yb = yc.astype(jnp.bfloat16)
        for p in range(th_in):                         # lane-aligned row stores
            o_ref[0, 0, c:c + 1, p * Wp:(p + 1) * Wp] = yb[p:p + 1, :]


# ---------------------------------------------------------------------------
# Kernel 2: fused conv1(9x9,3->64)+ReLU + conv2(1x1,64->32)+ReLU + conv3(5x5,32->3)
# on one row tile.  Transposed layout everywhere (channels x flattened pixels).
#   x_ref : (1, 1, C, Lt) bf16 padded upsampled tile (rows t*th1-2 .. t*th1+th1+9)
#   o_ref : (1, 3, th1, Wout) f32 final output rows [t*th1, t*th1+th1)
# scratch: xdx (28, Lt), xcol (252, nb*Wp), z (32, (Hz+1)*Wp), zcol (160, th1*Wp+128)
# ---------------------------------------------------------------------------
def _fused_conv_kernel(x_ref, w1_ref, b1_ref, w2_ref, b2_ref, w3_ref, b3_ref,
                       o_ref, xdx_ref, xcol_ref, z_ref, zcol_ref,
                       *, C, Hout, Wout, th1, Wp, nb):
    K1, K3, P3 = 9, 5, 2
    CK = C * K1                       # 27 real rows of the dx-expanded slab
    CKP = xdx_ref.shape[0]            # padded to an even row count (28)
    C2 = z_ref.shape[0]               # 32
    C3 = b3_ref.shape[0]              # 3
    Lt = xdx_ref.shape[1]
    Hz = th1 + 2 * P3                 # conv1/conv2 rows computed per tile
    Lz3 = zcol_ref.shape[1]
    t = pl.program_id(1)

    # ---- (a) in-VMEM dx expansion of the 3-channel tile (row = cin*9 + dx).
    ntail = K1 - 1
    xdx_ref[:, Lt - ntail:Lt] = jnp.zeros((CKP, ntail), jnp.bfloat16)
    if CKP > CK:                       # zero pad row (paired with zero weight cols)
        xdx_ref[CK:CKP, 0:Lt - ntail] = jnp.zeros((CKP - CK, Lt - ntail), jnp.bfloat16)
    for c in range(C):
        for dx in range(K1):
            r = c * K1 + dx
            xdx_ref[r:r + 1, 0:Lt - ntail] = x_ref[0, 0, c:c + 1, dx:dx + Lt - ntail]

    # ---- (b) conv2 activation grid; its zero borders are conv3's zero padding.
    z_ref[...] = jnp.zeros(z_ref.shape, z_ref.dtype)

    # loop-invariant operands / masks (hoisted out of the band loop)
    w1 = w1_ref[...]
    b1 = b1_ref[...]
    w2 = w2_ref[...]
    b2 = b2_ref[...]
    colmask = (jax.lax.broadcasted_iota(jnp.int32, (1, Wp), 1) < Wout
               ).astype(jnp.float32)
    zeros_row = jnp.zeros_like(colmask)
    row0 = t * th1 - P3                # global conv row held by z row 0

    # ---- (c) conv1 as ONE deep MXU dot per row band, fused conv2 epilogue.
    for j0 in range(0, Hz, nb):
        nbc = min(nb, Hz - j0)
        nlane = nbc * Wp
        for dy in range(K1):           # dy-stacked operand: lane-aligned VMEM copies
            src = (j0 + dy) * Wp
            xcol_ref[dy * CKP:(dy + 1) * CKP, 0:nlane] = xdx_ref[:, src:src + nlane]
        acc = jnp.dot(w1, xcol_ref[:, 0:nlane],
                      preferred_element_type=jnp.float32)           # (64, nlane)
        h1 = jnp.maximum(acc + b1, 0.0).astype(jnp.bfloat16)
        h2 = jnp.maximum(jnp.dot(w2, h1, preferred_element_type=jnp.float32) + b2,
                         0.0)                                        # (32, nlane)
        # zero lanes that are conv3 padding (gutter cols, out-of-range rows)
        pieces = []
        for r in range(nbc):
            grow = row0 + j0 + r
            ok = jnp.logical_and(grow >= 0, grow < Hout)
            pieces.append(jnp.where(ok, colmask, zeros_row))
        mask = pieces[0] if nbc == 1 else jnp.concatenate(pieces, axis=1)
        h2 = (h2 * mask).astype(jnp.bfloat16)
        # +P3 lane shift: conv2 column c lands at lane c+2 (left conv3 padding)
        z_ref[:, j0 * Wp + P3:j0 * Wp + P3 + nlane] = h2

    # ---- (d) conv3: dy folded into K (5*32), dx folded into M (5*3),
    #          one dot + 5 lane-shifted partial adds, per-row lane-aligned stores.
    for dy in range(K3):
        zcol_ref[dy * C2:(dy + 1) * C2, :] = z_ref[:, dy * Wp:dy * Wp + Lz3]
    part = jnp.dot(w3_ref[...], zcol_ref[...],
                   preferred_element_type=jnp.float32)               # (15, Lz3)
    acc3 = part[0:C3, 0:th1 * Wp]
    for dx in range(1, K3):
        acc3 = acc3 + part[dx * C3:(dx + 1) * C3, dx:dx + th1 * Wp]
    acc3 = acc3 + b3_ref[...]
    for r in range(th1):
        o_ref[0, :, r, :] = acc3[:, r * Wp:r * Wp + Wout]


# ---------------------------------------------------------------------------
# Full forward pass
# ---------------------------------------------------------------------------
def strange_srnet_forward(params, x_nchw, upscale_factor):
    # NewInterpolate: scales.tolist()[-2:]  (static scale factors)
    sh = float(np.asarray(upscale_factor)[-2])
    sw = float(np.asarray(upscale_factor)[-1])
    N, C, H, W = x_nchw.shape
    Hout, Wout = int(np.floor(H * sh)), int(np.floor(W * sw))

    w1, b1 = params["w1"], params["b1"]          # (64, 3, 9, 9), (64,)
    w2, b2 = params["w2"], params["b2"]          # (32, 64, 1, 1), (32,)
    w3, b3 = params["w3"], params["b3"]          # (3, 32, 5, 5), (3,)
    C1, K1 = w1.shape[0], w1.shape[2]            # 64, 9
    C2 = w2.shape[0]                             # 32
    C3, K3 = w3.shape[0], w3.shape[2]            # 3, 5
    P1, P3 = K1 // 2, K3 // 2                    # 4, 2
    assert C == w1.shape[1]

    # ---- tiled, lane-aligned padded-grid geometry
    th1 = 16 if Hout >= 16 else 8                # output rows per grid tile
    T = pl.cdiv(Hout, th1)
    th_in = th1 + 2 * (P1 + P3)                  # padded rows one tile needs (+halo)
    Wp = ((Wout + 2 * P1 + 127) // 128) * 128    # padded width, multiple of 128
    Lt = th_in * Wp                              # flattened padded pixels per tile
    Hz = th1 + 2 * P3                            # conv1/conv2 rows per tile
    Lz3 = th1 * Wp + 128
    nb = max(1, min(Hz, 512 // Wp))              # conv rows per MXU band (~512+ lanes)
    CK = C * K1
    CKP = CK + (CK % 2)                          # 28: even group stride in xcol

    ah_t, awt = _build_interp_matrices(H, W, Hout, Wout, th1, T, th_in, Wp, P1, P3)

    cp = pltpu.CompilerParams(
        dimension_semantics=("parallel", "parallel"),
        vmem_limit_bytes=48 * 1024 * 1024,
    )

    # ---- stage 1: bicubic upsample -> bf16 flattened, zero-padded row tiles
    xt = pl.pallas_call(
        functools.partial(_interp_kernel, C=C),
        out_shape=jax.ShapeDtypeStruct((N, T, C, Lt), jnp.bfloat16),
        grid_spec=pltpu.PrefetchScalarGridSpec(
            num_scalar_prefetch=0,
            grid=(N, T),
            in_specs=[
                pl.BlockSpec((1, C, H, W), lambda n, t: (n, 0, 0, 0)),
                pl.BlockSpec((1, th_in, H), lambda n, t: (t, 0, 0)),
                pl.BlockSpec((W, Wp), lambda n, t: (0, 0)),
            ],
            out_specs=pl.BlockSpec((1, 1, C, Lt), lambda n, t: (n, t, 0, 0)),
        ),
        compiler_params=cp,
    )(x_nchw.astype(jnp.float32), ah_t, awt)

    # ---- weights repacked for the transposed (channels x pixels) matmuls
    # conv1: column index = dy*CKP + (cin*9 + dx); pad column of each dy-group is 0
    w1g = jnp.transpose(w1, (0, 2, 1, 3)).reshape(C1, K1, CK)
    w1f = jnp.pad(w1g, ((0, 0), (0, 0), (0, CKP - CK))).reshape(C1, K1 * CKP)
    w1f = w1f.astype(jnp.bfloat16)
    b1v = b1.reshape(C1, 1).astype(jnp.float32)
    w2m = w2[:, :, 0, 0].astype(jnp.bfloat16)                         # (32, 64)
    b2v = b2.reshape(C2, 1).astype(jnp.float32)
    # conv3: rows = dx*3 + o, cols = dy*32 + cin
    w3r = jnp.transpose(w3, (3, 0, 2, 1)).reshape(K3 * C3, K3 * C2).astype(jnp.bfloat16)
    b3v = b3.reshape(C3, 1).astype(jnp.float32)

    # ---- stage 2: fused conv1 + ReLU + conv2 + ReLU + conv3 (all in VMEM)
    y = pl.pallas_call(
        functools.partial(_fused_conv_kernel, C=C, Hout=Hout, Wout=Wout,
                          th1=th1, Wp=Wp, nb=nb),
        out_shape=jax.ShapeDtypeStruct((N, C3, T * th1, Wout), jnp.float32),
        grid_spec=pltpu.PrefetchScalarGridSpec(
            num_scalar_prefetch=0,
            grid=(N, T),
            in_specs=[
                pl.BlockSpec((1, 1, C, Lt), lambda n, t: (n, t, 0, 0)),
                pl.BlockSpec((C1, K1 * CKP), lambda n, t: (0, 0)),
                pl.BlockSpec((C1, 1), lambda n, t: (0, 0)),
                pl.BlockSpec((C2, C1), lambda n, t: (0, 0)),
                pl.BlockSpec((C2, 1), lambda n, t: (0, 0)),
                pl.BlockSpec((K3 * C3, K3 * C2), lambda n, t: (0, 0)),
                pl.BlockSpec((C3, 1), lambda n, t: (0, 0)),
            ],
            out_specs=pl.BlockSpec((1, C3, th1, Wout), lambda n, t: (n, 0, t, 0)),
            scratch_shapes=[
                pltpu.VMEM((CKP, Lt), jnp.bfloat16),               # dx-expanded tile
                pltpu.VMEM((K1 * CKP, nb * Wp), jnp.bfloat16),     # K=252 band operand
                pltpu.VMEM((C2, (Hz + 1) * Wp), jnp.bfloat16),     # conv2 activations
                pltpu.VMEM((K3 * C2, Lz3), jnp.bfloat16),          # dy-expanded conv3 rhs
            ],
        ),
        compiler_params=cp,
    )(xt, w1f, b1v, w2m, b2v, w3r, b3v)

    if T * th1 != Hout:                # ragged last tile only; no-op otherwise
        y = y[:, :, :Hout, :]
    return y


# ---------------------------------------------------------------------------
# Pure-JAX reference (f32) for a correctness sanity check
# ---------------------------------------------------------------------------
def _reference_forward(params, x, upscale_factor):
    sh = float(np.asarray(upscale_factor)[-2])
    sw = float(np.asarray(upscale_factor)[-1])
    N, C, H, W = x.shape
    Hout, Wout = int(np.floor(H * sh)), int(np.floor(W * sw))
    Ah = jnp.asarray(bicubic_matrix(H, Hout))
    Aw = jnp.asarray(bicubic_matrix(W, Wout))
    xu = jnp.einsum("oh,nchw,pw->ncop", Ah, x.astype(jnp.float32), Aw)

    def conv(h, w, b, pad):
        out = jax.lax.conv_general_dilated(
            h, w, (1, 1), [(pad, pad), (pad, pad)],
            dimension_numbers=("NCHW", "OIHW", "NCHW"))
        return out + b.reshape(1, -1, 1, 1)

    h = jax.nn.relu(conv(xu, params["w1"], params["b1"], 4))
    h = jax.nn.relu(conv(h, params["w2"], params["b2"], 0))
    return conv(h, params["w3"], params["b3"], 2)


# ---------------------------------------------------------------------------
# Deterministic parameter init (PyTorch-style uniform(-1/sqrt(fan_in), ...))
# ---------------------------------------------------------------------------
def init_params(key):
    ks = jax.random.split(key, 6)

    def conv_init(kw_, kb_, cout, cin, k):
        bound = 1.0 / np.sqrt(cin * k * k)
        w = jax.random.uniform(kw_, (cout, cin, k, k), jnp.float32, -bound, bound)
        b = jax.random.uniform(kb_, (cout,), jnp.float32, -bound, bound)
        return w, b

    w1, b1 = conv_init(ks[0], ks[1], 64, 3, 9)
    w2, b2 = conv_init(ks[2], ks[3], 32, 64, 1)
    w3, b3 = conv_init(ks[4], ks[5], 3, 32, 5)
    return dict(w1=w1, b1=b1, w2=w2, b2=b2, w3=w3, b3=b3)


if __name__ == "__main__":
    key = jax.random.PRNGKey(0)
    kx, kp = jax.random.split(key)
    # small shapes consistent with the module: NCHW, 3 input channels
    x = jax.random.normal(kx, (2, 3, 16, 16), dtype=jnp.float32)
    upscale_factor = np.array([1.0, 1.0, 2.0, 2.0], dtype=np.float32)
    params = init_params(kp)

    out = strange_srnet_forward(params, x, upscale_factor)
    out = jax.block_until_ready(out)
    assert out.shape == (2, 3, 32, 32), out.shape
    assert out.dtype == jnp.float32

    ref = jax.block_until_ready(_reference_forward(params, x, upscale_factor))
    # bf16 conv operands (f32 accumulation) -> small drift vs the f32 reference
    err = float(jnp.max(jnp.abs(out - ref)))
    assert err < 5e-2, f"max abs error vs reference: {err}"

    print("KERNEL_OK")
</pallas_src>

<mosaic_0001>
module attributes {stable_mosaic.version = 11 : i64} {
  func.func @_interp_kernel(%arg0: i32, %arg1: i32, %arg2: memref<1x3x16x16xf32, #tpu.memory_space<vmem>>, %arg3: memref<1x28x16xf32, #tpu.memory_space<vmem>>, %arg4: memref<16x128xf32, #tpu.memory_space<vmem>>, %arg5: memref<1x1x3x3584xbf16, #tpu.memory_space<vmem>>) attributes {dimension_semantics = [#tpu.dimension_semantics<parallel>, #tpu.dimension_semantics<parallel>], iteration_bounds = array<i64: 2, 2>, scalar_prefetch = 0 : i64, scratch_operands = 0 : i64, tpu.core_type = #tpu.core_type<tc>, window_params = [{transform_indices = @transform_0, window_bounds = array<i64: 1, 3, 16, 16>}, {transform_indices = @transform_1, window_bounds = array<i64: 1, 28, 16>}, {pipeline_mode = #tpu.pipeline_mode<synchronous>, transform_indices = @transform_2, window_bounds = array<i64: 16, 128>}, {transform_indices = @transform_3, window_bounds = array<i64: 1, 1, 3, 3584>}]} {
    %c0 = arith.constant 0 : index
    %c0_0 = arith.constant 0 : index
    %c0_1 = arith.constant 0 : index
    %0 = vector.load %arg3[%c0, %c0_0, %c0_1] : memref<1x28x16xf32, #tpu.memory_space<vmem>>, vector<1x28x16xf32>
    %1 = vector.shape_cast %0 : vector<1x28x16xf32> to vector<28x16xf32>
    %c0_2 = arith.constant 0 : index
    %c0_3 = arith.constant 0 : index
    %2 = vector.load %arg4[%c0_2, %c0_3] : memref<16x128xf32, #tpu.memory_space<vmem>>, vector<16x128xf32>
    %c0_4 = arith.constant 0 : index
    %c0_5 = arith.constant 0 : index
    %c0_6 = arith.constant 0 : index
    %c0_7 = arith.constant 0 : index
    %3 = vector.load %arg2[%c0_4, %c0_5, %c0_6, %c0_7] : memref<1x3x16x16xf32, #tpu.memory_space<vmem>>, vector<1x1x16x16xf32>
    %4 = vector.shape_cast %3 : vector<1x1x16x16xf32> to vector<16x16xf32>
    %cst = arith.constant dense<0.000000e+00> : vector<16x128xf32>
    %5 = tpu.matmul %4, %2, %cst {dimension_numbers = #tpu.dot_dimension_numbers<[1], [0], [0], [1], [0, 0, 1, 1], [], []>} : vector<16x16xf32>, vector<16x128xf32>, vector<16x128xf32> -> vector<16x128xf32>
    %cst_8 = arith.constant dense<0.000000e+00> : vector<28x128xf32>
    %6 = tpu.matmul %1, %5, %cst_8 {dimension_numbers = #tpu.dot_dimension_numbers<[1], [0], [0], [1], [0, 0, 1, 1], [], []>} : vector<28x16xf32>, vector<16x128xf32>, vector<28x128xf32> -> vector<28x128xf32>
    %7 = arith.truncf %6 : vector<28x128xf32> to vector<28x128xbf16>
    %8 = vector.extract_strided_slice %7 {offsets = [0, 0], sizes = [1, 128], strides = [1, 1]} : vector<28x128xbf16> to vector<1x128xbf16>
    %c0_9 = arith.constant 0 : index
    %c0_10 = arith.constant 0 : index
    %c0_11 = arith.constant 0 : index
    %c0_12 = arith.constant 0 : index
    %9 = vector.load %arg5[%c0_9, %c0_10, %c0_11, %c0_12] : memref<1x1x3x3584xbf16, #tpu.memory_space<vmem>>, vector<1x1x1x128xbf16>
    %10 = vector.shape_cast %9 : vector<1x1x1x128xbf16> to vector<1x128xbf16>
    %11 = vector.shape_cast %8 : vector<1x128xbf16> to vector<1x1x1x128xbf16>
    tpu.vector_store %arg5[%c0_9, %c0_10, %c0_11, %c0_12], %11 {strides = array<i32>} : memref<1x1x3x3584xbf16, #tpu.memory_space<vmem>>, vector<1x1x1x128xbf16>,
    %12 = vector.extract_strided_slice %7 {offsets = [1, 0], sizes = [1, 128], strides = [1, 1]} : vector<28x128xbf16> to vector<1x128xbf16>
    %c0_13 = arith.constant 0 : index
    %c0_14 = arith.constant 0 : index
    %c0_15 = arith.constant 0 : index
    %c128 = arith.constant 128 : index
    %13 = vector.load %arg5[%c0_13, %c0_14, %c0_15, %c128] : memref<1x1x3x3584xbf16, #tpu.memory_space<vmem>>, vector<1x1x1x128xbf16>
    %14 = vector.shape_cast %13 : vector<1x1x1x128xbf16> to vector<1x128xbf16>
    %15 = vector.shape_cast %12 : vector<1x128xbf16> to vector<1x1x1x128xbf16>
    tpu.vector_store %arg5[%c0_13, %c0_14, %c0_15, %c128], %15 {strides = array<i32>} : memref<1x1x3x3584xbf16, #tpu.memory_space<vmem>>, vector<1x1x1x128xbf16>,
    %16 = vector.extract_strided_slice %7 {offsets = [2, 0], sizes = [1, 128], strides = [1, 1]} : vector<28x128xbf16> to vector<1x128xbf16>
    %c0_16 = arith.constant 0 : index
    %c0_17 = arith.constant 0 : index
    %c0_18 = arith.constant 0 : index
    %c256 = arith.constant 256 : index
    %17 = vector.load %arg5[%c0_16, %c0_17, %c0_18, %c256] : memref<1x1x3x3584xbf16, #tpu.memory_space<vmem>>, vector<1x1x1x128xbf16>
    %18 = vector.shape_cast %17 : vector<1x1x1x128xbf16> to vector<1x128xbf16>
    %19 = vector.shape_cast %16 : vector<1x128xbf16> to vector<1x1x1x128xbf16>
    tpu.vector_store %arg5[%c0_16, %c0_17, %c0_18, %c256], %19 {strides = array<i32>} : memref<1x1x3x3584xbf16, #tpu.memory_space<vmem>>, vector<1x1x1x128xbf16>,
    %20 = vector.extract_strided_slice %7 {offsets = [3, 0], sizes = [1, 128], strides = [1, 1]} : vector<28x128xbf16> to vector<1x128xbf16>
    %c0_19 = arith.constant 0 : index
    %c0_20 = arith.constant 0 : index
    %c0_21 = arith.constant 0 : index
    %c384 = arith.constant 384 : index
    %21 = vector.load %arg5[%c0_19, %c0_20, %c0_21, %c384] : memref<1x1x3x3584xbf16, #tpu.memory_space<vmem>>, vector<1x1x1x128xbf16>
    %22 = vector.shape_cast %21 : vector<1x1x1x128xbf16> to vector<1x128xbf16>
    %23 = vector.shape_cast %20 : vector<1x128xbf16> to vector<1x1x1x128xbf16>
    tpu.vector_store %arg5[%c0_19, %c0_20, %c0_21, %c384], %23 {strides = array<i32>} : memref<1x1x3x3584xbf16, #tpu.memory_space<vmem>>, vector<1x1x1x128xbf16>,
    %24 = vector.extract_strided_slice %7 {offsets = [4, 0], sizes = [1, 128], strides = [1, 1]} : vector<28x128xbf16> to vector<1x128xbf16>
    %c0_22 = arith.constant 0 : index
    %c0_23 = arith.constant 0 : index
    %c0_24 = arith.constant 0 : index
    %c512 = arith.constant 512 : index
    %25 = vector.load %arg5[%c0_22, %c0_23, %c0_24, %c512] : memref<1x1x3x3584xbf16, #tpu.memory_space<vmem>>, vector<1x1x1x128xbf16>
    %26 = vector.shape_cast %25 : vector<1x1x1x128xbf16> to vector<1x128xbf16>
    %27 = vector.shape_cast %24 : vector<1x128xbf16> to vector<1x1x1x128xbf16>
    tpu.vector_store %arg5[%c0_22, %c0_23, %c0_24, %c512], %27 {strides = array<i32>} : memref<1x1x3x3584xbf16, #tpu.memory_space<vmem>>, vector<1x1x1x128xbf16>,
    %28 = vector.extract_strided_slice %7 {offsets = [5, 0], sizes = [1, 128], strides = [1, 1]} : vector<28x128xbf16> to vector<1x128xbf16>
    %c0_25 = arith.constant 0 : index
    %c0_26 = arith.constant 0 : index
    %c0_27 = arith.constant 0 : index
    %c640 = arith.constant 640 : index
    %29 = vector.load %arg5[%c0_25, %c0_26, %c0_27, %c640] : memref<1x1x3x3584xbf16, #tpu.memory_space<vmem>>, vector<1x1x1x128xbf16>
    %30 = vector.shape_cast %29 : vector<1x1x1x128xbf16> to vector<1x128xbf16>
    %31 = vector.shape_cast %28 : vector<1x128xbf16> to vector<1x1x1x128xbf16>
    tpu.vector_store %arg5[%c0_25, %c0_26, %c0_27, %c640], %31 {strides = array<i32>} : memref<1x1x3x3584xbf16, #tpu.memory_space<vmem>>, vector<1x1x1x128xbf16>,
    %32 = vector.extract_strided_slice %7 {offsets = [6, 0], sizes = [1, 128], strides = [1, 1]} : vector<28x128xbf16> to vector<1x128xbf16>
    %c0_28 = arith.constant 0 : index
    %c0_29 = arith.constant 0 : index
    %c0_30 = arith.constant 0 : index
    %c768 = arith.constant 768 : index
    %33 = vector.load %arg5[%c0_28, %c0_29, %c0_30, %c768] : memref<1x1x3x3584xbf16, #tpu.memory_space<vmem>>, vector<1x1x1x128xbf16>
    %34 = vector.shape_cast %33 : vector<1x1x1x128xbf16> to vector<1x128xbf16>
    %35 = vector.shape_cast %32 : vector<1x128xbf16> to vector<1x1x1x128xbf16>
    tpu.vector_store %arg5[%c0_28, %c0_29, %c0_30, %c768], %35 {strides = array<i32>} : memref<1x1x3x3584xbf16, #tpu.memory_space<vmem>>, vector<1x1x1x128xbf16>,
    %36 = vector.extract_strided_slice %7 {offsets = [7, 0], sizes = [1, 128], strides = [1, 1]} : vector<28x128xbf16> to vector<1x128xbf16>
    %c0_31 = arith.constant 0 : index
    %c0_32 = arith.constant 0 : index
    %c0_33 = arith.constant 0 : index
    %c896 = arith.constant 896 : index
    %37 = vector.load %arg5[%c0_31, %c0_32, %c0_33, %c896] : memref<1x1x3x3584xbf16, #tpu.memory_space<vmem>>, vector<1x1x1x128xbf16>
    %38 = vector.shape_cast %37 : vector<1x1x1x128xbf16> to vector<1x128xbf16>
    %39 = vector.shape_cast %36 : vector<1x128xbf16> to vector<1x1x1x128xbf16>
    tpu.vector_store %arg5[%c0_31, %c0_32, %c0_33, %c896], %39 {strides = array<i32>} : memref<1x1x3x3584xbf16, #tpu.memory_space<vmem>>, vector<1x1x1x128xbf16>,
    %40 = vector.extract_strided_slice %7 {offsets = [8, 0], sizes = [1, 128], strides = [1, 1]} : vector<28x128xbf16> to vector<1x128xbf16>
    %c0_34 = arith.constant 0 : index
    %c0_35 = arith.constant 0 : index
    %c0_36 = arith.constant 0 : index
    %c1024 = arith.constant 1024 : index
    %41 = vector.load %arg5[%c0_34, %c0_35, %c0_36, %c1024] : memref<1x1x3x3584xbf16, #tpu.memory_space<vmem>>, vector<1x1x1x128xbf16>
    %42 = vector.shape_cast %41 : vector<1x1x1x128xbf16> to vector<1x128xbf16>
    %43 = vector.shape_cast %40 : vector<1x128xbf16> to vector<1x1x1x128xbf16>
    tpu.vector_store %arg5[%c0_34, %c0_35, %c0_36, %c1024], %43 {strides = array<i32>} : memref<1x1x3x3584xbf16, #tpu.memory_space<vmem>>, vector<1x1x1x128xbf16>,
    %44 = vector.extract_strided_slice %7 {offsets = [9, 0], sizes = [1, 128], strides = [1, 1]} : vector<28x128xbf16> to vector<1x128xbf16>
    %c0_37 = arith.constant 0 : index
    %c0_38 = arith.constant 0 : index
    %c0_39 = arith.constant 0 : index
    %c1152 = arith.constant 1152 : index
    %45 = vector.load %arg5[%c0_37, %c0_38, %c0_39, %c1152] : memref<1x1x3x3584xbf16, #tpu.memory_space<vmem>>, vector<1x1x1x128xbf16>
    %46 = vector.shape_cast %45 : vector<1x1x1x128xbf16> to vector<1x128xbf16>
    %47 = vector.shape_cast %44 : vector<1x128xbf16> to vector<1x1x1x128xbf16>
    tpu.vector_store %arg5[%c0_37, %c0_38, %c0_39, %c1152], %47 {strides = array<i32>} : memref<1x1x3x3584xbf16, #tpu.memory_space<vmem>>, vector<1x1x1x128xbf16>,
    %48 = vector.extract_strided_slice %7 {offsets = [10, 0], sizes = [1, 128], strides = [1, 1]} : vector<28x128xbf16> to vector<1x128xbf16>
    %c0_40 = arith.constant 0 : index
    %c0_41 = arith.constant 0 : index
    %c0_42 = arith.constant 0 : index
    %c1280 = arith.constant 1280 : index
    %49 = vector.load %arg5[%c0_40, %c0_41, %c0_42, %c1280] : memref<1x1x3x3584xbf16, #tpu.memory_space<vmem>>, vector<1x1x1x128xbf16>
    %50 = vector.shape_cast %49 : vector<1x1x1x128xbf16> to vector<1x128xbf16>
    %51 = vector.shape_cast %48 : vector<1x128xbf16> to vector<1x1x1x128xbf16>
    tpu.vector_store %arg5[%c0_40, %c0_41, %c0_42, %c1280], %51 {strides = array<i32>} : memref<1x1x3x3584xbf16, #tpu.memory_space<vmem>>, vector<1x1x1x128xbf16>,
    %52 = vector.extract_strided_slice %7 {offsets = [11, 0], sizes = [1, 128], strides = [1, 1]} : vector<28x128xbf16> to vector<1x128xbf16>
    %c0_43 = arith.constant 0 : index
    %c0_44 = arith.constant 0 : index
    %c0_45 = arith.constant 0 : index
    %c1408 = arith.constant 1408 : index
    %53 = vector.load %arg5[%c0_43, %c0_44, %c0_45, %c1408] : memref<1x1x3x3584xbf16, #tpu.memory_space<vmem>>, vector<1x1x1x128xbf16>
    %54 = vector.shape_cast %53 : vector<1x1x1x128xbf16> to vector<1x128xbf16>
    %55 = vector.shape_cast %52 : vector<1x128xbf16> to vector<1x1x1x128xbf16>
    tpu.vector_store %arg5[%c0_43, %c0_44, %c0_45, %c1408], %55 {strides = array<i32>} : memref<1x1x3x3584xbf16, #tpu.memory_space<vmem>>, vector<1x1x1x128xbf16>,
    %56 = vector.extract_strided_slice %7 {offsets = [12, 0], sizes = [1, 128], strides = [1, 1]} : vector<28x128xbf16> to vector<1x128xbf16>
    %c0_46 = arith.constant 0 : index
    %c0_47 = arith.constant 0 : index
    %c0_48 = arith.constant 0 : index
    %c1536 = arith.constant 1536 : index
    %57 = vector.load %arg5[%c0_46, %c0_47, %c0_48, %c1536] : memref<1x1x3x3584xbf16, #tpu.memory_space<vmem>>, vector<1x1x1x128xbf16>
    %58 = vector.shape_cast %57 : vector<1x1x1x128xbf16> to vector<1x128xbf16>
    %59 = vector.shape_cast %56 : vector<1x128xbf16> to vector<1x1x1x128xbf16>
    tpu.vector_store %arg5[%c0_46, %c0_47, %c0_48, %c1536], %59 {strides = array<i32>} : memref<1x1x3x3584xbf16, #tpu.memory_space<vmem>>, vector<1x1x1x128xbf16>,
    %60 = vector.extract_strided_slice %7 {offsets = [13, 0], sizes = [1, 128], strides = [1, 1]} : vector<28x128xbf16> to vector<1x128xbf16>
    %c0_49 = arith.constant 0 : index
    %c0_50 = arith.constant 0 : index
    %c0_51 = arith.constant 0 : index
    %c1664 = arith.constant 1664 : index
    %61 = vector.load %arg5[%c0_49, %c0_50, %c0_51, %c1664] : memref<1x1x3x3584xbf16, #tpu.memory_space<vmem>>, vector<1x1x1x128xbf16>
    %62 = vector.shape_cast %61 : vector<1x1x1x128xbf16> to vector<1x128xbf16>
    %63 = vector.shape_cast %60 : vector<1x128xbf16> to vector<1x1x1x128xbf16>
    tpu.vector_store %arg5[%c0_49, %c0_50, %c0_51, %c1664], %63 {strides = array<i32>} : memref<1x1x3x3584xbf16, #tpu.memory_space<vmem>>, vector<1x1x1x128xbf16>,
    %64 = vector.extract_strided_slice %7 {offsets = [14, 0], sizes = [1, 128], strides = [1, 1]} : vector<28x128xbf16> to vector<1x128xbf16>
    %c0_52 = arith.constant 0 : index
    %c0_53 = arith.constant 0 : index
    %c0_54 = arith.constant 0 : index
    %c1792 = arith.constant 1792 : index
    %65 = vector.load %arg5[%c0_52, %c0_53, %c0_54, %c1792] : memref<1x1x3x3584xbf16, #tpu.memory_space<vmem>>, vector<1x1x1x128xbf16>
    %66 = vector.shape_cast %65 : vector<1x1x1x128xbf16> to vector<1x128xbf16>
    %67 = vector.shape_cast %64 : vector<1x128xbf16> to vector<1x1x1x128xbf16>
    tpu.vector_store %arg5[%c0_52, %c0_53, %c0_54, %c1792], %67 {strides = array<i32>} : memref<1x1x3x3584xbf16, #tpu.memory_space<vmem>>, vector<1x1x1x128xbf16>,
    %68 = vector.extract_strided_slice %7 {offsets = [15, 0], sizes = [1, 128], strides = [1, 1]} : vector<28x128xbf16> to vector<1x128xbf16>
    %c0_55 = arith.constant 0 : index
    %c0_56 = arith.constant 0 : index
    %c0_57 = arith.constant 0 : index
    %c1920 = arith.constant 1920 : index
    %69 = vector.load %arg5[%c0_55, %c0_56, %c0_57, %c1920] : memref<1x1x3x3584xbf16, #tpu.memory_space<vmem>>, vector<1x1x1x128xbf16>
    %70 = vector.shape_cast %69 : vector<1x1x1x128xbf16> to vector<1x128xbf16>
    %71 = vector.shape_cast %68 : vector<1x128xbf16> to vector<1x1x1x128xbf16>
    tpu.vector_store %arg5[%c0_55, %c0_56, %c0_57, %c1920], %71 {strides = array<i32>} : memref<1x1x3x3584xbf16, #tpu.memory_space<vmem>>, vector<1x1x1x128xbf16>,
    %72 = vector.extract_strided_slice %7 {offsets = [16, 0], sizes = [1, 128], strides = [1, 1]} : vector<28x128xbf16> to vector<1x128xbf16>
    %c0_58 = arith.constant 0 : index
    %c0_59 = arith.constant 0 : index
    %c0_60 = arith.constant 0 : index
    %c2048 = arith.constant 2048 : index
    %73 = vector.load %arg5[%c0_58, %c0_59, %c0_60, %c2048] : memref<1x1x3x3584xbf16, #tpu.memory_space<vmem>>, vector<1x1x1x128xbf16>
    %74 = vector.shape_cast %73 : vector<1x1x1x128xbf16> to vector<1x128xbf16>
    %75 = vector.shape_cast %72 : vector<1x128xbf16> to vector<1x1x1x128xbf16>
    tpu.vector_store %arg5[%c0_58, %c0_59, %c0_60, %c2048], %75 {strides = array<i32>} : memref<1x1x3x3584xbf16, #tpu.memory_space<vmem>>, vector<1x1x1x128xbf16>,
    %76 = vector.extract_strided_slice %7 {offsets = [17, 0], sizes = [1, 128], strides = [1, 1]} : vector<28x128xbf16> to vector<1x128xbf16>
    %c0_61 = arith.constant 0 : index
    %c0_62 = arith.constant 0 : index
    %c0_63 = arith.constant 0 : index
    %c2176 = arith.constant 2176 : index
    %77 = vector.load %arg5[%c0_61, %c0_62, %c0_63, %c2176] : memref<1x1x3x3584xbf16, #tpu.memory_space<vmem>>, vector<1x1x1x128xbf16>
    %78 = vector.shape_cast %77 : vector<1x1x1x128xbf16> to vector<1x128xbf16>
    %79 = vector.shape_cast %76 : vector<1x128xbf16> to vector<1x1x1x128xbf16>
    tpu.vector_store %arg5[%c0_61, %c0_62, %c0_63, %c2176], %79 {strides = array<i32>} : memref<1x1x3x3584xbf16, #tpu.memory_space<vmem>>, vector<1x1x1x128xbf16>,
    %80 = vector.extract_strided_slice %7 {offsets = [18, 0], sizes = [1, 128], strides = [1, 1]} : vector<28x128xbf16> to vector<1x128xbf16>
    %c0_64 = arith.constant 0 : index
    %c0_65 = arith.constant 0 : index
    %c0_66 = arith.constant 0 : index
    %c2304 = arith.constant 2304 : index
    %81 = vector.load %arg5[%c0_64, %c0_65, %c0_66, %c2304] : memref<1x1x3x3584xbf16, #tpu.memory_space<vmem>>, vector<1x1x1x128xbf16>
    %82 = vector.shape_cast %81 : vector<1x1x1x128xbf16> to vector<1x128xbf16>
    %83 = vector.shape_cast %80 : vector<1x128xbf16> to vector<1x1x1x128xbf16>
    tpu.vector_store %arg5[%c0_64, %c0_65, %c0_66, %c2304], %83 {strides = array<i32>} : memref<1x1x3x3584xbf16, #tpu.memory_space<vmem>>, vector<1x1x1x128xbf16>,
    %84 = vector.extract_strided_slice %7 {offsets = [19, 0], sizes = [1, 128], strides = [1, 1]} : vector<28x128xbf16> to vector<1x128xbf16>
    %c0_67 = arith.constant 0 : index
    %c0_68 = arith.constant 0 : index
    %c0_69 = arith.constant 0 : index
    %c2432 = arith.constant 2432 : index
    %85 = vector.load %arg5[%c0_67, %c0_68, %c0_69, %c2432] : memref<1x1x3x3584xbf16, #tpu.memory_space<vmem>>, vector<1x1x1x128xbf16>
    %86 = vector.shape_cast %85 : vector<1x1x1x128xbf16> to vector<1x128xbf16>
    %87 = vector.shape_cast %84 : vector<1x128xbf16> to vector<1x1x1x128xbf16>
    tpu.vector_store %arg5[%c0_67, %c0_68, %c0_69, %c2432], %87 {strides = array<i32>} : memref<1x1x3x3584xbf16, #tpu.memory_space<vmem>>, vector<1x1x1x128xbf16>,
    %88 = vector.extract_strided_slice %7 {offsets = [20, 0], sizes = [1, 128], strides = [1, 1]} : vector<28x128xbf16> to vector<1x128xbf16>
    %c0_70 = arith.constant 0 : index
    %c0_71 = arith.constant 0 : index
    %c0_72 = arith.constant 0 : index
    %c2560 = arith.constant 2560 : index
    %89 = vector.load %arg5[%c0_70, %c0_71, %c0_72, %c2560] : memref<1x1x3x3584xbf16, #tpu.memory_space<vmem>>, vector<1x1x1x128xbf16>
    %90 = vector.shape_cast %89 : vector<1x1x1x128xbf16> to vector<1x128xbf16>
    %91 = vector.shape_cast %88 : vector<1x128xbf16> to vector<1x1x1x128xbf16>
    tpu.vector_store %arg5[%c0_70, %c0_71, %c0_72, %c2560], %91 {strides = array<i32>} : memref<1x1x3x3584xbf16, #tpu.memory_space<vmem>>, vector<1x1x1x128xbf16>,
    %92 = vector.extract_strided_slice %7 {offsets = [21, 0], sizes = [1, 128], strides = [1, 1]} : vector<28x128xbf16> to vector<1x128xbf16>
    %c0_73 = arith.constant 0 : index
    %c0_74 = arith.constant 0 : index
    %c0_75 = arith.constant 0 : index
    %c2688 = arith.constant 2688 : index
    %93 = vector.load %arg5[%c0_73, %c0_74, %c0_75, %c2688] : memref<1x1x3x3584xbf16, #tpu.memory_space<vmem>>, vector<1x1x1x128xbf16>
    %94 = vector.shape_cast %93 : vector<1x1x1x128xbf16> to vector<1x128xbf16>
    %95 = vector.shape_cast %92 : vector<1x128xbf16> to vector<1x1x1x128xbf16>
    tpu.vector_store %arg5[%c0_73, %c0_74, %c0_75, %c2688], %95 {strides = array<i32>} : memref<1x1x3x3584xbf16, #tpu.memory_space<vmem>>, vector<1x1x1x128xbf16>,
    %96 = vector.extract_strided_slice %7 {offsets = [22, 0], sizes = [1, 128], strides = [1, 1]} : vector<28x128xbf16> to vector<1x128xbf16>
    %c0_76 = arith.constant 0 : index
    %c0_77 = arith.constant 0 : index
    %c0_78 = arith.constant 0 : index
    %c2816 = arith.constant 2816 : index
    %97 = vector.load %arg5[%c0_76, %c0_77, %c0_78, %c2816] : memref<1x1x3x3584xbf16, #tpu.memory_space<vmem>>, vector<1x1x1x128xbf16>
    %98 = vector.shape_cast %97 : vector<1x1x1x128xbf16> to vector<1x128xbf16>
    %99 = vector.shape_cast %96 : vector<1x128xbf16> to vector<1x1x1x128xbf16>
    tpu.vector_store %arg5[%c0_76, %c0_77, %c0_78, %c2816], %99 {strides = array<i32>} : memref<1x1x3x3584xbf16, #tpu.memory_space<vmem>>, vector<1x1x1x128xbf16>,
    %100 = vector.extract_strided_slice %7 {offsets = [23, 0], sizes = [1, 128], strides = [1, 1]} : vector<28x128xbf16> to vector<1x128xbf16>
    %c0_79 = arith.constant 0 : index
    %c0_80 = arith.constant 0 : index
    %c0_81 = arith.constant 0 : index
    %c2944 = arith.constant 2944 : index
    %101 = vector.load %arg5[%c0_79, %c0_80, %c0_81, %c2944] : memref<1x1x3x3584xbf16, #tpu.memory_space<vmem>>, vector<1x1x1x128xbf16>
    %102 = vector.shape_cast %101 : vector<1x1x1x128xbf16> to vector<1x128xbf16>
    %103 = vector.shape_cast %100 : vector<1x128xbf16> to vector<1x1x1x128xbf16>
    tpu.vector_store %arg5[%c0_79, %c0_80, %c0_81, %c2944], %103 {strides = array<i32>} : memref<1x1x3x3584xbf16, #tpu.memory_space<vmem>>, vector<1x1x1x128xbf16>,
    %104 = vector.extract_strided_slice %7 {offsets = [24, 0], sizes = [1, 128], strides = [1, 1]} : vector<28x128xbf16> to vector<1x128xbf16>
    %c0_82 = arith.constant 0 : index
    %c0_83 = arith.constant 0 : index
    %c0_84 = arith.constant 0 : index
    %c3072 = arith.constant 3072 : index
    %105 = vector.load %arg5[%c0_82, %c0_83, %c0_84, %c3072] : memref<1x1x3x3584xbf16, #tpu.memory_space<vmem>>, vector<1x1x1x128xbf16>
    %106 = vector.shape_cast %105 : vector<1x1x1x128xbf16> to vector<1x128xbf16>
    %107 = vector.shape_cast %104 : vector<1x128xbf16> to vector<1x1x1x128xbf16>
    tpu.vector_store %arg5[%c0_82, %c0_83, %c0_84, %c3072], %107 {strides = array<i32>} : memref<1x1x3x3584xbf16, #tpu.memory_space<vmem>>, vector<1x1x1x128xbf16>,
    %108 = vector.extract_strided_slice %7 {offsets = [25, 0], sizes = [1, 128], strides = [1, 1]} : vector<28x128xbf16> to vector<1x128xbf16>
    %c0_85 = arith.constant 0 : index
    %c0_86 = arith.constant 0 : index
    %c0_87 = arith.constant 0 : index
    %c3200 = arith.constant 3200 : index
    %109 = vector.load %arg5[%c0_85, %c0_86, %c0_87, %c3200] : memref<1x1x3x3584xbf16, #tpu.memory_space<vmem>>, vector<1x1x1x128xbf16>
    %110 = vector.shape_cast %109 : vector<1x1x1x128xbf16> to vector<1x128xbf16>
    %111 = vector.shape_cast %108 : vector<1x128xbf16> to vector<1x1x1x128xbf16>
    tpu.vector_store %arg5[%c0_85, %c0_86, %c0_87, %c3200], %111 {strides = array<i32>} : memref<1x1x3x3584xbf16, #tpu.memory_space<vmem>>, vector<1x1x1x128xbf16>,
    %112 = vector.extract_strided_slice %7 {offsets = [26, 0], sizes = [1, 128], strides = [1, 1]} : vector<28x128xbf16> to vector<1x128xbf16>
    %c0_88 = arith.constant 0 : index
    %c0_89 = arith.constant 0 : index
    %c0_90 = arith.constant 0 : index
    %c3328 = arith.constant 3328 : index
    %113 = vector.load %arg5[%c0_88, %c0_89, %c0_90, %c3328] : memref<1x1x3x3584xbf16, #tpu.memory_space<vmem>>, vector<1x1x1x128xbf16>
    %114 = vector.shape_cast %113 : vector<1x1x1x128xbf16> to vector<1x128xbf16>
    %115 = vector.shape_cast %112 : vector<1x128xbf16> to vector<1x1x1x128xbf16>
    tpu.vector_store %arg5[%c0_88, %c0_89, %c0_90, %c3328], %115 {strides = array<i32>} : memref<1x1x3x3584xbf16, #tpu.memory_space<vmem>>, vector<1x1x1x128xbf16>,
    %116 = vector.extract_strided_slice %7 {offsets = [27, 0], sizes = [1, 128], strides = [1, 1]} : vector<28x128xbf16> to vector<1x128xbf16>
    %c0_91 = arith.constant 0 : index
    %c0_92 = arith.constant 0 : index
    %c0_93 = arith.constant 0 : index
    %c3456 = arith.constant 3456 : index
    %117 = vector.load %arg5[%c0_91, %c0_92, %c0_93, %c3456] : memref<1x1x3x3584xbf16, #tpu.memory_space<vmem>>, vector<1x1x1x128xbf16>
    %118 = vector.shape_cast %117 : vector<1x1x1x128xbf16> to vector<1x128xbf16>
    %119 = vector.shape_cast %116 : vector<1x128xbf16> to vector<1x1x1x128xbf16>
    tpu.vector_store %arg5[%c0_91, %c0_92, %c0_93, %c3456], %119 {strides = array<i32>} : memref<1x1x3x3584xbf16, #tpu.memory_space<vmem>>, vector<1x1x1x128xbf16>,
    %c0_94 = arith.constant 0 : index
    %c1 = arith.constant 1 : index
    %c0_95 = arith.constant 0 : index
    %c0_96 = arith.constant 0 : index
    %120 = vector.load %arg2[%c0_94, %c1, %c0_95, %c0_96] : memref<1x3x16x16xf32, #tpu.memory_space<vmem>>, vector<1x1x16x16xf32>
    %121 = vector.shape_cast %120 : vector<1x1x16x16xf32> to vector<16x16xf32>
    %cst_97 = arith.constant dense<0.000000e+00> : vector<16x128xf32>
    %122 = tpu.matmul %121, %2, %cst_97 {dimension_numbers = #tpu.dot_dimension_numbers<[1], [0], [0], [1], [0, 0, 1, 1], [], []>} : vector<16x16xf32>, vector<16x128xf32>, vector<16x128xf32> -> vector<16x128xf32>
    %cst_98 = arith.constant dense<0.000000e+00> : vector<28x128xf32>
    %123 = tpu.matmul %1, %122, %cst_98 {dimension_numbers = #tpu.dot_dimension_numbers<[1], [0], [0], [1], [0, 0, 1, 1], [], []>} : vector<28x16xf32>, vector<16x128xf32>, vector<28x128xf32> -> vector<28x128xf32>
    %124 = arith.truncf %123 : vector<28x128xf32> to vector<28x128xbf16>
    %125 = vector.extract_strided_slice %124 {offsets = [0, 0], sizes = [1, 128], strides = [1, 1]} : vector<28x128xbf16> to vector<1x128xbf16>
    %c0_99 = arith.constant 0 : index
    %c0_100 = arith.constant 0 : index
    %c1_101 = arith.constant 1 : index
    %c0_102 = arith.constant 0 : index
    %126 = vector.load %arg5[%c0_99, %c0_100, %c1_101, %c0_102] : memref<1x1x3x3584xbf16, #tpu.memory_space<vmem>>, vector<1x1x1x128xbf16>
    %127 = vector.shape_cast %126 : vector<1x1x1x128xbf16> to vector<1x128xbf16>
    %128 = vector.shape_cast %125 : vector<1x128xbf16> to vector<1x1x1x128xbf16>
    tpu.vector_store %arg5[%c0_99, %c0_100, %c1_101, %c0_102], %128 {strides = array<i32>} : memref<1x1x3x3584xbf16, #tpu.memory_space<vmem>>, vector<1x1x1x128xbf16>,
    %129 = vector.extract_strided_slice %124 {offsets = [1, 0], sizes = [1, 128], strides = [1, 1]} : vector<28x128xbf16> to vector<1x128xbf16>
    %c0_103 = arith.constant 0 : index
    %c0_104 = arith.constant 0 : index
    %c1_105 = arith.constant 1 : index
    %c128_106 = arith.constant 128 : index
    %130 = vector.load %arg5[%c0_103, %c0_104, %c1_105, %c128_106] : memref<1x1x3x3584xbf16, #tpu.memory_space<vmem>>, vector<1x1x1x128xbf16>
    %131 = vector.shape_cast %130 : vector<1x1x1x128xbf16> to vector<1x128xbf16>
    %132 = vector.shape_cast %129 : vector<1x128xbf16> to vector<1x1x1x128xbf16>
    tpu.vector_store %arg5[%c0_103, %c0_104, %c1_105, %c128_106], %132 {strides = array<i32>} : memref<1x1x3x3584xbf16, #tpu.memory_space<vmem>>, vector<1x1x1x128xbf16>,
    %133 = vector.extract_strided_slice %124 {offsets = [2, 0], sizes = [1, 128], strides = [1, 1]} : vector<28x128xbf16> to vector<1x128xbf16>
    %c0_107 = arith.constant 0 : index
    %c0_108 = arith.constant 0 : index
    %c1_109 = arith.constant 1 : index
    %c256_110 = arith.constant 256 : index
    %134 = vector.load %arg5[%c0_107, %c0_108, %c1_109, %c256_110] : memref<1x1x3x3584xbf16, #tpu.memory_space<vmem>>, vector<1x1x1x128xbf16>
    %135 = vector.shape_cast %134 : vector<1x1x1x128xbf16> to vector<1x128xbf16>
    %136 = vector.shape_cast %133 : vector<1x128xbf16> to vector<1x1x1x128xbf16>
    tpu.vector_store %arg5[%c0_107, %c0_108, %c1_109, %c256_110], %136 {strides = array<i32>} : memref<1x1x3x3584xbf16, #tpu.memory_space<vmem>>, vector<1x1x1x128xbf16>,
    %137 = vector.extract_strided_slice %124 {offsets = [3, 0], sizes = [1, 128], strides = [1, 1]} : vector<28x128xbf16> to vector<1x128xbf16>
    %c0_111 = arith.constant 0 : index
    %c0_112 = arith.constant 0 : index
    %c1_113 = arith.constant 1 : index
    %c384_114 = arith.constant 384 : index
    %138 = vector.load %arg5[%c0_111, %c0_112, %c1_113, %c384_114] : memref<1x1x3x3584xbf16, #tpu.memory_space<vmem>>, vector<1x1x1x128xbf16>
    %139 = vector.shape_cast %138 : vector<1x1x1x128xbf16> to vector<1x128xbf16>
    %140 = vector.shape_cast %137 : vector<1x128xbf16> to vector<1x1x1x128xbf16>
    tpu.vector_store %arg5[%c0_111, %c0_112, %c1_113, %c384_114], %140 {strides = array<i32>} : memref<1x1x3x3584xbf16, #tpu.memory_space<vmem>>, vector<1x1x1x128xbf16>,
    %141 = vector.extract_strided_slice %124 {offsets = [4, 0], sizes = [1, 128], strides = [1, 1]} : vector<28x128xbf16> to vector<1x128xbf16>
    %c0_115 = arith.constant 0 : index
    %c0_116 = arith.constant 0 : index
    %c1_117 = arith.constant 1 : index
    %c512_118 = arith.constant 512 : index
    %142 = vector.load %arg5[%c0_115, %c0_116, %c1_117, %c512_118] : memref<1x1x3x3584xbf16, #tpu.memory_space<vmem>>, vector<1x1x1x128xbf16>
    %143 = vector.shape_cast %142 : vector<1x1x1x128xbf16> to vector<1x128xbf16>
    %144 = vector.shape_cast %141 : vector<1x128xbf16> to vector<1x1x1x128xbf16>
    tpu.vector_store %arg5[%c0_115, %c0_116, %c1_117, %c512_118], %144 {strides = array<i32>} : memref<1x1x3x3584xbf16, #tpu.memory_space<vmem>>, vector<1x1x1x128xbf16>,
    %145 = vector.extract_strided_slice %124 {offsets = [5, 0], sizes = [1, 128], strides = [1, 1]} : vector<28x128xbf16> to vector<1x128xbf16>
    %c0_119 = arith.constant 0 : index
    %c0_120 = arith.constant 0 : index
    %c1_121 = arith.constant 1 : index
    %c640_122 = arith.constant 640 : index
    %146 = vector.load %arg5[%c0_119, %c0_120, %c1_121, %c640_122] : memref<1x1x3x3584xbf16, #tpu.memory_space<vmem>>, vector<1x1x1x128xbf16>
    %147 = vector.shape_cast %146 : vector<1x1x1x128xbf16> to vector<1x128xbf16>
    %148 = vector.shape_cast %145 : vector<1x128xbf16> to vector<1x1x1x128xbf16>
    tpu.vector_store %arg5[%c0_119, %c0_120, %c1_121, %c640_122], %148 {strides = array<i32>} : memref<1x1x3x3584xbf16, #tpu.memory_space<vmem>>, vector<1x1x1x128xbf16>,
    %149 = vector.extract_strided_slice %124 {offsets = [6, 0], sizes = [1, 128], strides = [1, 1]} : vector<28x128xbf16> to vector<1x128xbf16>
    %c0_123 = arith.constant 0 : index
    %c0_124 = arith.constant 0 : index
    %c1_125 = arith.constant 1 : index
    %c768_126 = arith.constant 768 : index
    %150 = vector.load %arg5[%c0_123, %c0_124, %c1_125, %c768_126] : memref<1x1x3x3584xbf16, #tpu.memory_space<vmem>>, vector<1x1x1x128xbf16>
    %151 = vector.shape_cast %150 : vector<1x1x1x128xbf16> to vector<1x128xbf16>
    %152 = vector.shape_cast %149 : vector<1x128xbf16> to vector<1x1x1x128xbf16>
    tpu.vector_store %arg5[%c0_123, %c0_124, %c1_125, %c768_126], %152 {strides = array<i32>} : memref<1x1x3x3584xbf16, #tpu.memory_space<vmem>>, vector<1x1x1x128xbf16>,
    %153 = vector.extract_strided_slice %124 {offsets = [7, 0], sizes = [1, 128], strides = [1, 1]} : vector<28x128xbf16> to vector<1x128xbf16>
    %c0_127 = arith.constant 0 : index
    %c0_128 = arith.constant 0 : index
    %c1_129 = arith.constant 1 : index
    %c896_130 = arith.constant 896 : index
    %154 = vector.load %arg5[%c0_127, %c0_128, %c1_129, %c896_130] : memref<1x1x3x3584xbf16, #tpu.memory_space<vmem>>, vector<1x1x1x128xbf16>
    %155 = vector.shape_cast %154 : vector<1x1x1x128xbf16> to vector<1x128xbf16>
    %156 = vector.shape_cast %153 : vector<1x128xbf16> to vector<1x1x1x128xbf16>
    tpu.vector_store %arg5[%c0_127, %c0_128, %c1_129, %c896_130], %156 {strides = array<i32>} : memref<1x1x3x3584xbf16, #tpu.memory_space<vmem>>, vector<1x1x1x128xbf16>,
    %157 = vector.extract_strided_slice %124 {offsets = [8, 0], sizes = [1, 128], strides = [1, 1]} : vector<28x128xbf16> to vector<1x128xbf16>
    %c0_131 = arith.constant 0 : index
    %c0_132 = arith.constant 0 : index
    %c1_133 = arith.constant 1 : index
    %c1024_134 = arith.constant 1024 : index
    %158 = vector.load %arg5[%c0_131, %c0_132, %c1_133, %c1024_134] : memref<1x1x3x3584xbf16, #tpu.memory_space<vmem>>, vector<1x1x1x128xbf16>
    %159 = vector.shape_cast %158 : vector<1x1x1x128xbf16> to vector<1x128xbf16>
    %160 = vector.shape_cast %157 : vector<1x128xbf16> to vector<1x1x1x128xbf16>
    tpu.vector_store %arg5[%c0_131, %c0_132, %c1_133, %c1024_134], %160 {strides = array<i32>} : memref<1x1x3x3584xbf16, #tpu.memory_space<vmem>>, vector<1x1x1x128xbf16>,
    %161 = vector.extract_strided_slice %124 {offsets = [9, 0], sizes = [1, 128], strides = [1, 1]} : vector<28x128xbf16> to vector<1x128xbf16>
    %c0_135 = arith.constant 0 : index
    %c0_136 = arith.constant 0 : index
    %c1_137 = arith.constant 1 : index
    %c1152_138 = arith.constant 1152 : index
    %162 = vector.load %arg5[%c0_135, %c0_136, %c1_137, %c1152_138] : memref<1x1x3x3584xbf16, #tpu.memory_space<vmem>>, vector<1x1x1x128xbf16>
    %163 = vector.shape_cast %162 : vector<1x1x1x128xbf16> to vector<1x128xbf16>
    %164 = vector.shape_cast %161 : vector<1x128xbf16> to vector<1x1x1x128xbf16>
    tpu.vector_store %arg5[%c0_135, %c0_136, %c1_137, %c1152_138], %164 {strides = array<i32>} : memref<1x1x3x3584xbf16, #tpu.memory_space<vmem>>, vector<1x1x1x128xbf16>,
    %165 = vector.extract_strided_slice %124 {offsets = [10, 0], sizes = [1, 128], strides = [1, 1]} : vector<28x128xbf16> to vector<1x128xbf16>
    %c0_139 = arith.constant 0 : index
    %c0_140 = arith.constant 0 : index
    %c1_141 = arith.constant 1 : index
    %c1280_142 = arith.constant 1280 : index
    %166 = vector.load %arg5[%c0_139, %c0_140, %c1_141, %c1280_142] : memref<1x1x3x3584xbf16, #tpu.memory_space<vmem>>, vector<1x1x1x128xbf16>
    %167 = vector.shape_cast %166 : vector<1x1x1x128xbf16> to vector<1x128xbf16>
    %168 = vector.shape_cast %165 : vector<1x128xbf16> to vector<1x1x1x128xbf16>
    tpu.vector_store %arg5[%c0_139, %c0_140, %c1_141, %c1280_142], %168 {strides = array<i32>} : memref<1x1x3x3584xbf16, #tpu.memory_space<vmem>>, vector<1x1x1x128xbf16>,
    %169 = vector.extract_strided_slice %124 {offsets = [11, 0], sizes = [1, 128], strides = [1, 1]} : vector<28x128xbf16> to vector<1x128xbf16>
    %c0_143 = arith.constant 0 : index
    %c0_144 = arith.constant 0 : index
    %c1_145 = arith.constant 1 : index
    %c1408_146 = arith.constant 1408 : index
    %170 = vector.load %arg5[%c0_143, %c0_144, %c1_145, %c1408_146] : memref<1x1x3x3584xbf16, #tpu.memory_space<vmem>>, vector<1x1x1x128xbf16>
    %171 = vector.shape_cast %170 : vector<1x1x1x128xbf16> to vector<1x128xbf16>
    %172 = vector.shape_cast %169 : vector<1x128xbf16> to vector<1x1x1x128xbf16>
    tpu.vector_store %arg5[%c0_143, %c0_144, %c1_145, %c1408_146], %172 {strides = array<i32>} : memref<1x1x3x3584xbf16, #tpu.memory_space<vmem>>, vector<1x1x1x128xbf16>,
    %173 = vector.extract_strided_slice %124 {offsets = [12, 0], sizes = [1, 128], strides = [1, 1]} : vector<28x128xbf16> to vector<1x128xbf16>
    %c0_147 = arith.constant 0 : index
    %c0_148 = arith.constant 0 : index
    %c1_149 = arith.constant 1 : index
    %c1536_150 = arith.constant 1536 : index
    %174 = vector.load %arg5[%c0_147, %c0_148, %c1_149, %c1536_150] : memref<1x1x3x3584xbf16, #tpu.memory_space<vmem>>, vector<1x1x1x128xbf16>
    %175 = vector.shape_cast %174 : vector<1x1x1x128xbf16> to vector<1x128xbf16>
    %176 = vector.shape_cast %173 : vector<1x128xbf16> to vector<1x1x1x128xbf16>
    tpu.vector_store %arg5[%c0_147, %c0_148, %c1_149, %c1536_150], %176 {strides = array<i32>} : memref<1x1x3x3584xbf16, #tpu.memory_space<vmem>>, vector<1x1x1x128xbf16>,
    %177 = vector.extract_strided_slice %124 {offsets = [13, 0], sizes = [1, 128], strides = [1, 1]} : vector<28x128xbf16> to vector<1x128xbf16>
    %c0_151 = arith.constant 0 : index
    %c0_152 = arith.constant 0 : index
    %c1_153 = arith.constant 1 : index
    %c1664_154 = arith.constant 1664 : index
    %178 = vector.load %arg5[%c0_151, %c0_152, %c1_153, %c1664_154] : memref<1x1x3x3584xbf16, #tpu.memory_space<vmem>>, vector<1x1x1x128xbf16>
    %179 = vector.shape_cast %178 : vector<1x1x1x128xbf16> to vector<1x128xbf16>
    %180 = vector.shape_cast %177 : vector<1x128xbf16> to vector<1x1x1x128xbf16>
    tpu.vector_store %arg5[%c0_151, %c0_152, %c1_153, %c1664_154], %180 {strides = array<i32>} : memref<1x1x3x3584xbf16, #tpu.memory_space<vmem>>, vector<1x1x1x128xbf16>,
    %181 = vector.extract_strided_slice %124 {offsets = [14, 0], sizes = [1, 128], strides = [1, 1]} : vector<28x128xbf16> to vector<1x128xbf16>
    %c0_155 = arith.constant 0 : index
    %c0_156 = arith.constant 0 : index
    %c1_157 = arith.constant 1 : index
    %c1792_158 = arith.constant 1792 : index
    %182 = vector.load %arg5[%c0_155, %c0_156, %c1_157, %c1792_158] : memref<1x1x3x3584xbf16, #tpu.memory_space<vmem>>, vector<1x1x1x128xbf16>
    %183 = vector.shape_cast %182 : vector<1x1x1x128xbf16> to vector<1x128xbf16>
    %184 = vector.shape_cast %181 : vector<1x128xbf16> to vector<1x1x1x128xbf16>
    tpu.vector_store %arg5[%c0_155, %c0_156, %c1_157, %c1792_158], %184 {strides = array<i32>} : memref<1x1x3x3584xbf16, #tpu.memory_space<vmem>>, vector<1x1x1x128xbf16>,
    %185 = vector.extract_strided_slice %124 {offsets = [15, 0], sizes = [1, 128], strides = [1, 1]} : vector<28x128xbf16> to vector<1x128xbf16>
    %c0_159 = arith.constant 0 : index
    %c0_160 = arith.constant 0 : index
    %c1_161 = arith.constant 1 : index
    %c1920_162 = arith.constant 1920 : index
    %186 = vector.load %arg5[%c0_159, %c0_160, %c1_161, %c1920_162] : memref<1x1x3x3584xbf16, #tpu.memory_space<vmem>>, vector<1x1x1x128xbf16>
    %187 = vector.shape_cast %186 : vector<1x1x1x128xbf16> to vector<1x128xbf16>
    %188 = vector.shape_cast %185 : vector<1x128xbf16> to vector<1x1x1x128xbf16>
    tpu.vector_store %arg5[%c0_159, %c0_160, %c1_161, %c1920_162], %188 {strides = array<i32>} : memref<1x1x3x3584xbf16, #tpu.memory_space<vmem>>, vector<1x1x1x128xbf16>,
    %189 = vector.extract_strided_slice %124 {offsets = [16, 0], sizes = [1, 128], strides = [1, 1]} : vector<28x128xbf16> to vector<1x128xbf16>
    %c0_163 = arith.constant 0 : index
    %c0_164 = arith.constant 0 : index
    %c1_165 = arith.constant 1 : index
    %c2048_166 = arith.constant 2048 : index
    %190 = vector.load %arg5[%c0_163, %c0_164, %c1_165, %c2048_166] : memref<1x1x3x3584xbf16, #tpu.memory_space<vmem>>, vector<1x1x1x128xbf16>
    %191 = vector.shape_cast %190 : vector<1x1x1x128xbf16> to vector<1x128xbf16>
    %192 = vector.shape_cast %189 : vector<1x128xbf16> to vector<1x1x1x128xbf16>
    tpu.vector_store %arg5[%c0_163, %c0_164, %c1_165, %c2048_166], %192 {strides = array<i32>} : memref<1x1x3x3584xbf16, #tpu.memory_space<vmem>>, vector<1x1x1x128xbf16>,
    %193 = vector.extract_strided_slice %124 {offsets = [17, 0], sizes = [1, 128], strides = [1, 1]} : vector<28x128xbf16> to vector<1x128xbf16>
    %c0_167 = arith.constant 0 : index
    %c0_168 = arith.constant 0 : index
    %c1_169 = arith.constant 1 : index
    %c2176_170 = arith.constant 2176 : index
    %194 = vector.load %arg5[%c0_167, %c0_168, %c1_169, %c2176_170] : memref<1x1x3x3584xbf16, #tpu.memory_space<vmem>>, vector<1x1x1x128xbf16>
    %195 = vector.shape_cast %194 : vector<1x1x1x128xbf16> to vector<1x128xbf16>
    %196 = vector.shape_cast %193 : vector<1x128xbf16> to vector<1x1x1x128xbf16>
    tpu.vector_store %arg5[%c0_167, %c0_168, %c1_169, %c2176_170], %196 {strides = array<i32>} : memref<1x1x3x3584xbf16, #tpu.memory_space<vmem>>, vector<1x1x1x128xbf16>,
    %197 = vector.extract_strided_slice %124 {offsets = [18, 0], sizes = [1, 128], strides = [1, 1]} : vector<28x128xbf16> to vector<1x128xbf16>
    %c0_171 = arith.constant 0 : index
    %c0_172 = arith.constant 0 : index
    %c1_173 = arith.constant 1 : index
    %c2304_174 = arith.constant 2304 : index
    %198 = vector.load %arg5[%c0_171, %c0_172, %c1_173, %c2304_174] : memref<1x1x3x3584xbf16, #tpu.memory_space<vmem>>, vector<1x1x1x128xbf16>
    %199 = vector.shape_cast %198 : vector<1x1x1x128xbf16> to vector<1x128xbf16>
    %200 = vector.shape_cast %197 : vector<1x128xbf16> to vector<1x1x1x128xbf16>
    tpu.vector_store %arg5[%c0_171, %c0_172, %c1_173, %c2304_174], %200 {strides = array<i32>} : memref<1x1x3x3584xbf16, #tpu.memory_space<vmem>>, vector<1x1x1x128xbf16>,
    %201 = vector.extract_strided_slice %124 {offsets = [19, 0], sizes = [1, 128], strides = [1, 1]} : vector<28x128xbf16> to vector<1x128xbf16>
    %c0_175 = arith.constant 0 : index
    %c0_176 = arith.constant 0 : index
    %c1_177 = arith.constant 1 : index
    %c2432_178 = arith.constant 2432 : index
    %202 = vector.load %arg5[%c0_175, %c0_176, %c1_177, %c2432_178] : memref<1x1x3x3584xbf16, #tpu.memory_space<vmem>>, vector<1x1x1x128xbf16>
    %203 = vector.shape_cast %202 : vector<1x1x1x128xbf16> to vector<1x128xbf16>
    %204 = vector.shape_cast %201 : vector<1x128xbf16> to vector<1x1x1x128xbf16>
    tpu.vector_store %arg5[%c0_175, %c0_176, %c1_177, %c2432_178], %204 {strides = array<i32>} : memref<1x1x3x3584xbf16, #tpu.memory_space<vmem>>, vector<1x1x1x128xbf16>,
    %205 = vector.extract_strided_slice %124 {offsets = [20, 0], sizes = [1, 128], strides = [1, 1]} : vector<28x128xbf16> to vector<1x128xbf16>
    %c0_179 = arith.constant 0 : index
    %c0_180 = arith.constant 0 : index
    %c1_181 = arith.constant 1 : index
    %c2560_182 = arith.constant 2560 : index
    %206 = vector.load %arg5[%c0_179, %c0_180, %c1_181, %c2560_182] : memref<1x1x3x3584xbf16, #tpu.memory_space<vmem>>, vector<1x1x1x128xbf16>
    %207 = vector.shape_cast %206 : vector<1x1x1x128xbf16> to vector<1x128xbf16>
    %208 = vector.shape_cast %205 : vector<1x128xbf16> to vector<1x1x1x128xbf16>
    tpu.vector_store %arg5[%c0_179, %c0_180, %c1_181, %c2560_182], %208 {strides = array<i32>} : memref<1x1x3x3584xbf16, #tpu.memory_space<vmem>>, vector<1x1x1x128xbf16>,
    %209 = vector.extract_strided_slice %124 {offsets = [21, 0], sizes = [1, 128], strides = [1, 1]} : vector<28x128xbf16> to vector<1x128xbf16>
    %c0_183 = arith.constant 0 : index
    %c0_184 = arith.constant 0 : index
    %c1_185 = arith.constant 1 : index
    %c2688_186 = arith.constant 2688 : index
    %210 = vector.load %arg5[%c0_183, %c0_184, %c1_185, %c2688_186] : memref<1x1x3x3584xbf16, #tpu.memory_space<vmem>>, vector<1x1x1x128xbf16>
    %211 = vector.shape_cast %210 : vector<1x1x1x128xbf16> to vector<1x128xbf16>
    %212 = vector.shape_cast %209 : vector<1x128xbf16> to vector<1x1x1x128xbf16>
    tpu.vector_store %arg5[%c0_183, %c0_184, %c1_185, %c2688_186], %212 {strides = array<i32>} : memref<1x1x3x3584xbf16, #tpu.memory_space<vmem>>, vector<1x1x1x128xbf16>,
    %213 = vector.extract_strided_slice %124 {offsets = [22, 0], sizes = [1, 128], strides = [1, 1]} : vector<28x128xbf16> to vector<1x128xbf16>
    %c0_187 = arith.constant 0 : index
    %c0_188 = arith.constant 0 : index
    %c1_189 = arith.constant 1 : index
    %c2816_190 = arith.constant 2816 : index
    %214 = vector.load %arg5[%c0_187, %c0_188, %c1_189, %c2816_190] : memref<1x1x3x3584xbf16, #tpu.memory_space<vmem>>, vector<1x1x1x128xbf16>
    %215 = vector.shape_cast %214 : vector<1x1x1x128xbf16> to vector<1x128xbf16>
    %216 = vector.shape_cast %213 : vector<1x128xbf16> to vector<1x1x1x128xbf16>
    tpu.vector_store %arg5[%c0_187, %c0_188, %c1_189, %c2816_190], %216 {strides = array<i32>} : memref<1x1x3x3584xbf16, #tpu.memory_space<vmem>>, vector<1x1x1x128xbf16>,
    %217 = vector.extract_strided_slice %124 {offsets = [23, 0], sizes = [1, 128], strides = [1, 1]} : vector<28x128xbf16> to vector<1x128xbf16>
    %c0_191 = arith.constant 0 : index
    %c0_192 = arith.constant 0 : index
    %c1_193 = arith.constant 1 : index
    %c2944_194 = arith.constant 2944 : index
    %218 = vector.load %arg5[%c0_191, %c0_192, %c1_193, %c2944_194] : memref<1x1x3x3584xbf16, #tpu.memory_space<vmem>>, vector<1x1x1x128xbf16>
    %219 = vector.shape_cast %218 : vector<1x1x1x128xbf16> to vector<1x128xbf16>
    %220 = vector.shape_cast %217 : vector<1x128xbf16> to vector<1x1x1x128xbf16>
    tpu.vector_store %arg5[%c0_191, %c0_192, %c1_193, %c2944_194], %220 {strides = array<i32>} : memref<1x1x3x3584xbf16, #tpu.memory_space<vmem>>, vector<1x1x1x128xbf16>,
    %221 = vector.extract_strided_slice %124 {offsets = [24, 0], sizes = [1, 128], strides = [1, 1]} : vector<28x128xbf16> to vector<1x128xbf16>
    %c0_195 = arith.constant 0 : index
    %c0_196 = arith.constant 0 : index
    %c1_197 = arith.constant 1 : index
    %c3072_198 = arith.constant 3072 : index
    %222 = vector.load %arg5[%c0_195, %c0_196, %c1_197, %c3072_198] : memref<1x1x3x3584xbf16, #tpu.memory_space<vmem>>, vector<1x1x1x128xbf16>
    %223 = vector.shape_cast %222 : vector<1x1x1x128xbf16> to vector<1x128xbf16>
    %224 = vector.shape_cast %221 : vector<1x128xbf16> to vector<1x1x1x128xbf16>
    tpu.vector_store %arg5[%c0_195, %c0_196, %c1_197, %c3072_198], %224 {strides = array<i32>} : memref<1x1x3x3584xbf16, #tpu.memory_space<vmem>>, vector<1x1x1x128xbf16>,
    %225 = vector.extract_strided_slice %124 {offsets = [25, 0], sizes = [1, 128], strides = [1, 1]} : vector<28x128xbf16> to vector<1x128xbf16>
    %c0_199 = arith.constant 0 : index
    %c0_200 = arith.constant 0 : index
    %c1_201 = arith.constant 1 : index
    %c3200_202 = arith.constant 3200 : index
    %226 = vector.load %arg5[%c0_199, %c0_200, %c1_201, %c3200_202] : memref<1x1x3x3584xbf16, #tpu.memory_space<vmem>>, vector<1x1x1x128xbf16>
    %227 = vector.shape_cast %226 : vector<1x1x1x128xbf16> to vector<1x128xbf16>
    %228 = vector.shape_cast %225 : vector<1x128xbf16> to vector<1x1x1x128xbf16>
    tpu.vector_store %arg5[%c0_199, %c0_200, %c1_201, %c3200_202], %228 {strides = array<i32>} : memref<1x1x3x3584xbf16, #tpu.memory_space<vmem>>, vector<1x1x1x128xbf16>,
    %229 = vector.extract_strided_slice %124 {offsets = [26, 0], sizes = [1, 128], strides = [1, 1]} : vector<28x128xbf16> to vector<1x128xbf16>
    %c0_203 = arith.constant 0 : index
    %c0_204 = arith.constant 0 : index
    %c1_205 = arith.constant 1 : index
    %c3328_206 = arith.constant 3328 : index
    %230 = vector.load %arg5[%c0_203, %c0_204, %c1_205, %c3328_206] : memref<1x1x3x3584xbf16, #tpu.memory_space<vmem>>, vector<1x1x1x128xbf16>
    %231 = vector.shape_cast %230 : vector<1x1x1x128xbf16> to vector<1x128xbf16>
    %232 = vector.shape_cast %229 : vector<1x128xbf16> to vector<1x1x1x128xbf16>
    tpu.vector_store %arg5[%c0_203, %c0_204, %c1_205, %c3328_206], %232 {strides = array<i32>} : memref<1x1x3x3584xbf16, #tpu.memory_space<vmem>>, vector<1x1x1x128xbf16>,
    %233 = vector.extract_strided_slice %124 {offsets = [27, 0], sizes = [1, 128], strides = [1, 1]} : vector<28x128xbf16> to vector<1x128xbf16>
    %c0_207 = arith.constant 0 : index
    %c0_208 = arith.constant 0 : index
    %c1_209 = arith.constant 1 : index
    %c3456_210 = arith.constant 3456 : index
    %234 = vector.load %arg5[%c0_207, %c0_208, %c1_209, %c3456_210] : memref<1x1x3x3584xbf16, #tpu.memory_space<vmem>>, vector<1x1x1x128xbf16>
    %235 = vector.shape_cast %234 : vector<1x1x1x128xbf16> to vector<1x128xbf16>
    %236 = vector.shape_cast %233 : vector<1x128xbf16> to vector<1x1x1x128xbf16>
    tpu.vector_store %arg5[%c0_207, %c0_208, %c1_209, %c3456_210], %236 {strides = array<i32>} : memref<1x1x3x3584xbf16, #tpu.memory_space<vmem>>, vector<1x1x1x128xbf16>,
    %c0_211 = arith.constant 0 : index
    %c2 = arith.constant 2 : index
    %c0_212 = arith.constant 0 : index
    %c0_213 = arith.constant 0 : index
    %237 = vector.load %arg2[%c0_211, %c2, %c0_212, %c0_213] : memref<1x3x16x16xf32, #tpu.memory_space<vmem>>, vector<1x1x16x16xf32>
    %238 = vector.shape_cast %237 : vector<1x1x16x16xf32> to vector<16x16xf32>
    %cst_214 = arith.constant dense<0.000000e+00> : vector<16x128xf32>
    %239 = tpu.matmul %238, %2, %cst_214 {dimension_numbers = #tpu.dot_dimension_numbers<[1], [0], [0], [1], [0, 0, 1, 1], [], []>} : vector<16x16xf32>, vector<16x128xf32>, vector<16x128xf32> -> vector<16x128xf32>
    %cst_215 = arith.constant dense<0.000000e+00> : vector<28x128xf32>
    %240 = tpu.matmul %1, %239, %cst_215 {dimension_numbers = #tpu.dot_dimension_numbers<[1], [0], [0], [1], [0, 0, 1, 1], [], []>} : vector<28x16xf32>, vector<16x128xf32>, vector<28x128xf32> -> vector<28x128xf32>
    %241 = arith.truncf %240 : vector<28x128xf32> to vector<28x128xbf16>
    %242 = vector.extract_strided_slice %241 {offsets = [0, 0], sizes = [1, 128], strides = [1, 1]} : vector<28x128xbf16> to vector<1x128xbf16>
    %c0_216 = arith.constant 0 : index
    %c0_217 = arith.constant 0 : index
    %c2_218 = arith.constant 2 : index
    %c0_219 = arith.constant 0 : index
    %243 = vector.load %arg5[%c0_216, %c0_217, %c2_218, %c0_219] : memref<1x1x3x3584xbf16, #tpu.memory_space<vmem>>, vector<1x1x1x128xbf16>
    %244 = vector.shape_cast %243 : vector<1x1x1x128xbf16> to vector<1x128xbf16>
    %245 = vector.shape_cast %242 : vector<1x128xbf16> to vector<1x1x1x128xbf16>
    tpu.vector_store %arg5[%c0_216, %c0_217, %c2_218, %c0_219], %245 {strides = array<i32>} : memref<1x1x3x3584xbf16, #tpu.memory_space<vmem>>, vector<1x1x1x128xbf16>,
    %246 = vector.extract_strided_slice %241 {offsets = [1, 0], sizes = [1, 128], strides = [1, 1]} : vector<28x128xbf16> to vector<1x128xbf16>
    %c0_220 = arith.constant 0 : index
    %c0_221 = arith.constant 0 : index
    %c2_222 = arith.constant 2 : index
    %c128_223 = arith.constant 128 : index
    %247 = vector.load %arg5[%c0_220, %c0_221, %c2_222, %c128_223] : memref<1x1x3x3584xbf16, #tpu.memory_space<vmem>>, vector<1x1x1x128xbf16>
    %248 = vector.shape_cast %247 : vector<1x1x1x128xbf16> to vector<1x128xbf16>
    %249 = vector.shape_cast %246 : vector<1x128xbf16> to vector<1x1x1x128xbf16>
    tpu.vector_store %arg5[%c0_220, %c0_221, %c2_222, %c128_223], %249 {strides = array<i32>} : memref<1x1x3x3584xbf16, #tpu.memory_space<vmem>>, vector<1x1x1x128xbf16>,
    %250 = vector.extract_strided_slice %241 {offsets = [2, 0], sizes = [1, 128], strides = [1, 1]} : vector<28x128xbf16> to vector<1x128xbf16>
    %c0_224 = arith.constant 0 : index
    %c0_225 = arith.constant 0 : index
    %c2_226 = arith.constant 2 : index
    %c256_227 = arith.constant 256 : index
    %251 = vector.load %arg5[%c0_224, %c0_225, %c2_226, %c256_227] : memref<1x1x3x3584xbf16, #tpu.memory_space<vmem>>, vector<1x1x1x128xbf16>
    %252 = vector.shape_cast %251 : vector<1x1x1x128xbf16> to vector<1x128xbf16>
    %253 = vector.shape_cast %250 : vector<1x128xbf16> to vector<1x1x1x128xbf16>
    tpu.vector_store %arg5[%c0_224, %c0_225, %c2_226, %c256_227], %253 {strides = array<i32>} : memref<1x1x3x3584xbf16, #tpu.memory_space<vmem>>, vector<1x1x1x128xbf16>,
    %254 = vector.extract_strided_slice %241 {offsets = [3, 0], sizes = [1, 128], strides = [1, 1]} : vector<28x128xbf16> to vector<1x128xbf16>
    %c0_228 = arith.constant 0 : index
    %c0_229 = arith.constant 0 : index
    %c2_230 = arith.constant 2 : index
    %c384_231 = arith.constant 384 : index
    %255 = vector.load %arg5[%c0_228, %c0_229, %c2_230, %c384_231] : memref<1x1x3x3584xbf16, #tpu.memory_space<vmem>>, vector<1x1x1x128xbf16>
    %256 = vector.shape_cast %255 : vector<1x1x1x128xbf16> to vector<1x128xbf16>
    %257 = vector.shape_cast %254 : vector<1x128xbf16> to vector<1x1x1x128xbf16>
    tpu.vector_store %arg5[%c0_228, %c0_229, %c2_230, %c384_231], %257 {strides = array<i32>} : memref<1x1x3x3584xbf16, #tpu.memory_space<vmem>>, vector<1x1x1x128xbf16>,
    %258 = vector.extract_strided_slice %241 {offsets = [4, 0], sizes = [1, 128], strides = [1, 1]} : vector<28x128xbf16> to vector<1x128xbf16>
    %c0_232 = arith.constant 0 : index
    %c0_233 = arith.constant 0 : index
    %c2_234 = arith.constant 2 : index
    %c512_235 = arith.constant 512 : index
    %259 = vector.load %arg5[%c0_232, %c0_233, %c2_234, %c512_235] : memref<1x1x3x3584xbf16, #tpu.memory_space<vmem>>, vector<1x1x1x128xbf16>
    %260 = vector.shape_cast %259 : vector<1x1x1x128xbf16> to vector<1x128xbf16>
    %261 = vector.shape_cast %258 : vector<1x128xbf16> to vector<1x1x1x128xbf16>
    tpu.vector_store %arg5[%c0_232, %c0_233, %c2_234, %c512_235], %261 {strides = array<i32>} : memref<1x1x3x3584xbf16, #tpu.memory_space<vmem>>, vector<1x1x1x128xbf16>,
    %262 = vector.extract_strided_slice %241 {offsets = [5, 0], sizes = [1, 128], strides = [1, 1]} : vector<28x128xbf16> to vector<1x128xbf16>
    %c0_236 = arith.constant 0 : index
    %c0_237 = arith.constant 0 : index
    %c2_238 = arith.constant 2 : index
    %c640_239 = arith.constant 640 : index
    %263 = vector.load %arg5[%c0_236, %c0_237, %c2_238, %c640_239] : memref<1x1x3x3584xbf16, #tpu.memory_space<vmem>>, vector<1x1x1x128xbf16>
    %264 = vector.shape_cast %263 : vector<1x1x1x128xbf16> to vector<1x128xbf16>
    %265 = vector.shape_cast %262 : vector<1x128xbf16> to vector<1x1x1x128xbf16>
    tpu.vector_store %arg5[%c0_236, %c0_237, %c2_238, %c640_239], %265 {strides = array<i32>} : memref<1x1x3x3584xbf16, #tpu.memory_space<vmem>>, vector<1x1x1x128xbf16>,
    %266 = vector.extract_strided_slice %241 {offsets = [6, 0], sizes = [1, 128], strides = [1, 1]} : vector<28x128xbf16> to vector<1x128xbf16>
    %c0_240 = arith.constant 0 : index
    %c0_241 = arith.constant 0 : index
    %c2_242 = arith.constant 2 : index
    %c768_243 = arith.constant 768 : index
    %267 = vector.load %arg5[%c0_240, %c0_241, %c2_242, %c768_243] : memref<1x1x3x3584xbf16, #tpu.memory_space<vmem>>, vector<1x1x1x128xbf16>
    %268 = vector.shape_cast %267 : vector<1x1x1x128xbf16> to vector<1x128xbf16>
    %269 = vector.shape_cast %266 : vector<1x128xbf16> to vector<1x1x1x128xbf16>
    tpu.vector_store %arg5[%c0_240, %c0_241, %c2_242, %c768_243], %269 {strides = array<i32>} : memref<1x1x3x3584xbf16, #tpu.memory_space<vmem>>, vector<1x1x1x128xbf16>,
    %270 = vector.extract_strided_slice %241 {offsets = [7, 0], sizes = [1, 128], strides = [1, 1]} : vector<28x128xbf16> to vector<1x128xbf16>
    %c0_244 = arith.constant 0 : index
    %c0_245 = arith.constant 0 : index
    %c2_246 = arith.constant 2 : index
    %c896_247 = arith.constant 896 : index
    %271 = vector.load %arg5[%c0_244, %c0_245, %c2_246, %c896_247] : memref<1x1x3x3584xbf16, #tpu.memory_space<vmem>>, vector<1x1x1x128xbf16>
    %272 = vector.shape_cast %271 : vector<1x1x1x128xbf16> to vector<1x128xbf16>
    %273 = vector.shape_cast %270 : vector<1x128xbf16> to vector<1x1x1x128xbf16>
    tpu.vector_store %arg5[%c0_244, %c0_245, %c2_246, %c896_247], %273 {strides = array<i32>} : memref<1x1x3x3584xbf16, #tpu.memory_space<vmem>>, vector<1x1x1x128xbf16>,
    %274 = vector.extract_strided_slice %241 {offsets = [8, 0], sizes = [1, 128], strides = [1, 1]} : vector<28x128xbf16> to vector<1x128xbf16>
    %c0_248 = arith.constant 0 : index
    %c0_249 = arith.constant 0 : index
    %c2_250 = arith.constant 2 : index
    %c1024_251 = arith.constant 1024 : index
    %275 = vector.load %arg5[%c0_248, %c0_249, %c2_250, %c1024_251] : memref<1x1x3x3584xbf16, #tpu.memory_space<vmem>>, vector<1x1x1x128xbf16>
    %276 = vector.shape_cast %275 : vector<1x1x1x128xbf16> to vector<1x128xbf16>
    %277 = vector.shape_cast %274 : vector<1x128xbf16> to vector<1x1x1x128xbf16>
    tpu.vector_store %arg5[%c0_248, %c0_249, %c2_250, %c1024_251], %277 {strides = array<i32>} : memref<1x1x3x3584xbf16, #tpu.memory_space<vmem>>, vector<1x1x1x128xbf16>,
    %278 = vector.extract_strided_slice %241 {offsets = [9, 0], sizes = [1, 128], strides = [1, 1]} : vector<28x128xbf16> to vector<1x128xbf16>
    %c0_252 = arith.constant 0 : index
    %c0_253 = arith.constant 0 : index
    %c2_254 = arith.constant 2 : index
    %c1152_255 = arith.constant 1152 : index
    %279 = vector.load %arg5[%c0_252, %c0_253, %c2_254, %c1152_255] : memref<1x1x3x3584xbf16, #tpu.memory_space<vmem>>, vector<1x1x1x128xbf16>
    %280 = vector.shape_cast %279 : vector<1x1x1x128xbf16> to vector<1x128xbf16>
    %281 = vector.shape_cast %278 : vector<1x128xbf16> to vector<1x1x1x128xbf16>
    tpu.vector_store %arg5[%c0_252, %c0_253, %c2_254, %c1152_255], %281 {strides = array<i32>} : memref<1x1x3x3584xbf16, #tpu.memory_space<vmem>>, vector<1x1x1x128xbf16>,
    %282 = vector.extract_strided_slice %241 {offsets = [10, 0], sizes = [1, 128], strides = [1, 1]} : vector<28x128xbf16> to vector<1x128xbf16>
    %c0_256 = arith.constant 0 : index
    %c0_257 = arith.constant 0 : index
    %c2_258 = arith.constant 2 : index
    %c1280_259 = arith.constant 1280 : index
    %283 = vector.load %arg5[%c0_256, %c0_257, %c2_258, %c1280_259] : memref<1x1x3x3584xbf16, #tpu.memory_space<vmem>>, vector<1x1x1x128xbf16>
    %284 = vector.shape_cast %283 : vector<1x1x1x128xbf16> to vector<1x128xbf16>
    %285 = vector.shape_cast %282 : vector<1x128xbf16> to vector<1x1x1x128xbf16>
    tpu.vector_store %arg5[%c0_256, %c0_257, %c2_258, %c1280_259], %285 {strides = array<i32>} : memref<1x1x3x3584xbf16, #tpu.memory_space<vmem>>, vector<1x1x1x128xbf16>,
    %286 = vector.extract_strided_slice %241 {offsets = [11, 0], sizes = [1, 128], strides = [1, 1]} : vector<28x128xbf16> to vector<1x128xbf16>
    %c0_260 = arith.constant 0 : index
    %c0_261 = arith.constant 0 : index
    %c2_262 = arith.constant 2 : index
    %c1408_263 = arith.constant 1408 : index
    %287 = vector.load %arg5[%c0_260, %c0_261, %c2_262, %c1408_263] : memref<1x1x3x3584xbf16, #tpu.memory_space<vmem>>, vector<1x1x1x128xbf16>
    %288 = vector.shape_cast %287 : vector<1x1x1x128xbf16> to vector<1x128xbf16>
    %289 = vector.shape_cast %286 : vector<1x128xbf16> to vector<1x1x1x128xbf16>
    tpu.vector_store %arg5[%c0_260, %c0_261, %c2_262, %c1408_263], %289 {strides = array<i32>} : memref<1x1x3x3584xbf16, #tpu.memory_space<vmem>>, vector<1x1x1x128xbf16>,
    %290 = vector.extract_strided_slice %241 {offsets = [12, 0], sizes = [1, 128], strides = [1, 1]} : vector<28x128xbf16> to vector<1x128xbf16>
    %c0_264 = arith.constant 0 : index
    %c0_265 = arith.constant 0 : index
    %c2_266 = arith.constant 2 : index
    %c1536_267 = arith.constant 1536 : index
    %291 = vector.load %arg5[%c0_264, %c0_265, %c2_266, %c1536_267] : memref<1x1x3x3584xbf16, #tpu.memory_space<vmem>>, vector<1x1x1x128xbf16>
    %292 = vector.shape_cast %291 : vector<1x1x1x128xbf16> to vector<1x128xbf16>
    %293 = vector.shape_cast %290 : vector<1x128xbf16> to vector<1x1x1x128xbf16>
    tpu.vector_store %arg5[%c0_264, %c0_265, %c2_266, %c1536_267], %293 {strides = array<i32>} : memref<1x1x3x3584xbf16, #tpu.memory_space<vmem>>, vector<1x1x1x128xbf16>,
    %294 = vector.extract_strided_slice %241 {offsets = [13, 0], sizes = [1, 128], strides = [1, 1]} : vector<28x128xbf16> to vector<1x128xbf16>
    %c0_268 = arith.constant 0 : index
    %c0_269 = arith.constant 0 : index
    %c2_270 = arith.constant 2 : index
    %c1664_271 = arith.constant 1664 : index
    %295 = vector.load %arg5[%c0_268, %c0_269, %c2_270, %c1664_271] : memref<1x1x3x3584xbf16, #tpu.memory_space<vmem>>, vector<1x1x1x128xbf16>
    %296 = vector.shape_cast %295 : vector<1x1x1x128xbf16> to vector<1x128xbf16>
    %297 = vector.shape_cast %294 : vector<1x128xbf16> to vector<1x1x1x128xbf16>
    tpu.vector_store %arg5[%c0_268, %c0_269, %c2_270, %c1664_271], %297 {strides = array<i32>} : memref<1x1x3x3584xbf16, #tpu.memory_space<vmem>>, vector<1x1x1x128xbf16>,
    %298 = vector.extract_strided_slice %241 {offsets = [14, 0], sizes = [1, 128], strides = [1, 1]} : vector<28x128xbf16> to vector<1x128xbf16>
    %c0_272 = arith.constant 0 : index
    %c0_273 = arith.constant 0 : index
    %c2_274 = arith.constant 2 : index
    %c1792_275 = arith.constant 1792 : index
    %299 = vector.load %arg5[%c0_272, %c0_273, %c2_274, %c1792_275] : memref<1x1x3x3584xbf16, #tpu.memory_space<vmem>>, vector<1x1x1x128xbf16>
    %300 = vector.shape_cast %299 : vector<1x1x1x128xbf16> to vector<1x128xbf16>
    %301 = vector.shape_cast %298 : vector<1x128xbf16> to vector<1x1x1x128xbf16>
    tpu.vector_store %arg5[%c0_272, %c0_273, %c2_274, %c1792_275], %301 {strides = array<i32>} : memref<1x1x3x3584xbf16, #tpu.memory_space<vmem>>, vector<1x1x1x128xbf16>,
    %302 = vector.extract_strided_slice %241 {offsets = [15, 0], sizes = [1, 128], strides = [1, 1]} : vector<28x128xbf16> to vector<1x128xbf16>
    %c0_276 = arith.constant 0 : index
    %c0_277 = arith.constant 0 : index
    %c2_278 = arith.constant 2 : index
    %c1920_279 = arith.constant 1920 : index
    %303 = vector.load %arg5[%c0_276, %c0_277, %c2_278, %c1920_279] : memref<1x1x3x3584xbf16, #tpu.memory_space<vmem>>, vector<1x1x1x128xbf16>
    %304 = vector.shape_cast %303 : vector<1x1x1x128xbf16> to vector<1x128xbf16>
    %305 = vector.shape_cast %302 : vector<1x128xbf16> to vector<1x1x1x128xbf16>
    tpu.vector_store %arg5[%c0_276, %c0_277, %c2_278, %c1920_279], %305 {strides = array<i32>} : memref<1x1x3x3584xbf16, #tpu.memory_space<vmem>>, vector<1x1x1x128xbf16>,
    %306 = vector.extract_strided_slice %241 {offsets = [16, 0], sizes = [1, 128], strides = [1, 1]} : vector<28x128xbf16> to vector<1x128xbf16>
    %c0_280 = arith.constant 0 : index
    %c0_281 = arith.constant 0 : index
    %c2_282 = arith.constant 2 : index
    %c2048_283 = arith.constant 2048 : index
    %307 = vector.load %arg5[%c0_280, %c0_281, %c2_282, %c2048_283] : memref<1x1x3x3584xbf16, #tpu.memory_space<vmem>>, vector<1x1x1x128xbf16>
    %308 = vector.shape_cast %307 : vector<1x1x1x128xbf16> to vector<1x128xbf16>
    %309 = vector.shape_cast %306 : vector<1x128xbf16> to vector<1x1x1x128xbf16>
    tpu.vector_store %arg5[%c0_280, %c0_281, %c2_282, %c2048_283], %309 {strides = array<i32>} : memref<1x1x3x3584xbf16, #tpu.memory_space<vmem>>, vector<1x1x1x128xbf16>,
    %310 = vector.extract_strided_slice %241 {offsets = [17, 0], sizes = [1, 128], strides = [1, 1]} : vector<28x128xbf16> to vector<1x128xbf16>
    %c0_284 = arith.constant 0 : index
    %c0_285 = arith.constant 0 : index
    %c2_286 = arith.constant 2 : index
    %c2176_287 = arith.constant 2176 : index
    %311 = vector.load %arg5[%c0_284, %c0_285, %c2_286, %c2176_287] : memref<1x1x3x3584xbf16, #tpu.memory_space<vmem>>, vector<1x1x1x128xbf16>
    %312 = vector.shape_cast %311 : vector<1x1x1x128xbf16> to vector<1x128xbf16>
    %313 = vector.shape_cast %310 : vector<1x128xbf16> to vector<1x1x1x128xbf16>
    tpu.vector_store %arg5[%c0_284, %c0_285, %c2_286, %c2176_287], %313 {strides = array<i32>} : memref<1x1x3x3584xbf16, #tpu.memory_space<vmem>>, vector<1x1x1x128xbf16>,
    %314 = vector.extract_strided_slice %241 {offsets = [18, 0], sizes = [1, 128], strides = [1, 1]} : vector<28x128xbf16> to vector<1x128xbf16>
    %c0_288 = arith.constant 0 : index
    %c0_289 = arith.constant 0 : index
    %c2_290 = arith.constant 2 : index
    %c2304_291 = arith.constant 2304 : index
    %315 = vector.load %arg5[%c0_288, %c0_289, %c2_290, %c2304_291] : memref<1x1x3x3584xbf16, #tpu.memory_space<vmem>>, vector<1x1x1x128xbf16>
    %316 = vector.shape_cast %315 : vector<1x1x1x128xbf16> to vector<1x128xbf16>
    %317 = vector.shape_cast %314 : vector<1x128xbf16> to vector<1x1x1x128xbf16>
    tpu.vector_store %arg5[%c0_288, %c0_289, %c2_290, %c2304_291], %317 {strides = array<i32>} : memref<1x1x3x3584xbf16, #tpu.memory_space<vmem>>, vector<1x1x1x128xbf16>,
    %318 = vector.extract_strided_slice %241 {offsets = [19, 0], sizes = [1, 128], strides = [1, 1]} : vector<28x128xbf16> to vector<1x128xbf16>
    %c0_292 = arith.constant 0 : index
    %c0_293 = arith.constant 0 : index
    %c2_294 = arith.constant 2 : index
    %c2432_295 = arith.constant 2432 : index
    %319 = vector.load %arg5[%c0_292, %c0_293, %c2_294, %c2432_295] : memref<1x1x3x3584xbf16, #tpu.memory_space<vmem>>, vector<1x1x1x128xbf16>
    %320 = vector.shape_cast %319 : vector<1x1x1x128xbf16> to vector<1x128xbf16>
    %321 = vector.shape_cast %318 : vector<1x128xbf16> to vector<1x1x1x128xbf16>
    tpu.vector_store %arg5[%c0_292, %c0_293, %c2_294, %c2432_295], %321 {strides = array<i32>} : memref<1x1x3x3584xbf16, #tpu.memory_space<vmem>>, vector<1x1x1x128xbf16>,
    %322 = vector.extract_strided_slice %241 {offsets = [20, 0], sizes = [1, 128], strides = [1, 1]} : vector<28x128xbf16> to vector<1x128xbf16>
    %c0_296 = arith.constant 0 : index
    %c0_297 = arith.constant 0 : index
    %c2_298 = arith.constant 2 : index
    %c2560_299 = arith.constant 2560 : index
    %323 = vector.load %arg5[%c0_296, %c0_297, %c2_298, %c2560_299] : memref<1x1x3x3584xbf16, #tpu.memory_space<vmem>>, vector<1x1x1x128xbf16>
    %324 = vector.shape_cast %323 : vector<1x1x1x128xbf16> to vector<1x128xbf16>
    %325 = vector.shape_cast %322 : vector<1x128xbf16> to vector<1x1x1x128xbf16>
    tpu.vector_store %arg5[%c0_296, %c0_297, %c2_298, %c2560_299], %325 {strides = array<i32>} : memref<1x1x3x3584xbf16, #tpu.memory_space<vmem>>, vector<1x1x1x128xbf16>,
    %326 = vector.extract_strided_slice %241 {offsets = [21, 0], sizes = [1, 128], strides = [1, 1]} : vector<28x128xbf16> to vector<1x128xbf16>
    %c0_300 = arith.constant 0 : index
    %c0_301 = arith.constant 0 : index
    %c2_302 = arith.constant 2 : index
    %c2688_303 = arith.constant 2688 : index
    %327 = vector.load %arg5[%c0_300, %c0_301, %c2_302, %c2688_303] : memref<1x1x3x3584xbf16, #tpu.memory_space<vmem>>, vector<1x1x1x128xbf16>
    %328 = vector.shape_cast %327 : vector<1x1x1x128xbf16> to vector<1x128xbf16>
    %329 = vector.shape_cast %326 : vector<1x128xbf16> to vector<1x1x1x128xbf16>
    tpu.vector_store %arg5[%c0_300, %c0_301, %c2_302, %c2688_303], %329 {strides = array<i32>} : memref<1x1x3x3584xbf16, #tpu.memory_space<vmem>>, vector<1x1x1x128xbf16>,
    %330 = vector.extract_strided_slice %241 {offsets = [22, 0], sizes = [1, 128], strides = [1, 1]} : vector<28x128xbf16> to vector<1x128xbf16>
    %c0_304 = arith.constant 0 : index
    %c0_305 = arith.constant 0 : index
    %c2_306 = arith.constant 2 : index
    %c2816_307 = arith.constant 2816 : index
    %331 = vector.load %arg5[%c0_304, %c0_305, %c2_306, %c2816_307] : memref<1x1x3x3584xbf16, #tpu.memory_space<vmem>>, vector<1x1x1x128xbf16>
    %332 = vector.shape_cast %331 : vector<1x1x1x128xbf16> to vector<1x128xbf16>
    %333 = vector.shape_cast %330 : vector<1x128xbf16> to vector<1x1x1x128xbf16>
    tpu.vector_store %arg5[%c0_304, %c0_305, %c2_306, %c2816_307], %333 {strides = array<i32>} : memref<1x1x3x3584xbf16, #tpu.memory_space<vmem>>, vector<1x1x1x128xbf16>,
    %334 = vector.extract_strided_slice %241 {offsets = [23, 0], sizes = [1, 128], strides = [1, 1]} : vector<28x128xbf16> to vector<1x128xbf16>
    %c0_308 = arith.constant 0 : index
    %c0_309 = arith.constant 0 : index
    %c2_310 = arith.constant 2 : index
    %c2944_311 = arith.constant 2944 : index
    %335 = vector.load %arg5[%c0_308, %c0_309, %c2_310, %c2944_311] : memref<1x1x3x3584xbf16, #tpu.memory_space<vmem>>, vector<1x1x1x128xbf16>
    %336 = vector.shape_cast %335 : vector<1x1x1x128xbf16> to vector<1x128xbf16>
    %337 = vector.shape_cast %334 : vector<1x128xbf16> to vector<1x1x1x128xbf16>
    tpu.vector_store %arg5[%c0_308, %c0_309, %c2_310, %c2944_311], %337 {strides = array<i32>} : memref<1x1x3x3584xbf16, #tpu.memory_space<vmem>>, vector<1x1x1x128xbf16>,
    %338 = vector.extract_strided_slice %241 {offsets = [24, 0], sizes = [1, 128], strides = [1, 1]} : vector<28x128xbf16> to vector<1x128xbf16>
    %c0_312 = arith.constant 0 : index
    %c0_313 = arith.constant 0 : index
    %c2_314 = arith.constant 2 : index
    %c3072_315 = arith.constant 3072 : index
    %339 = vector.load %arg5[%c0_312, %c0_313, %c2_314, %c3072_315] : memref<1x1x3x3584xbf16, #tpu.memory_space<vmem>>, vector<1x1x1x128xbf16>
    %340 = vector.shape_cast %339 : vector<1x1x1x128xbf16> to vector<1x128xbf16>
    %341 = vector.shape_cast %338 : vector<1x128xbf16> to vector<1x1x1x128xbf16>
    tpu.vector_store %arg5[%c0_312, %c0_313, %c2_314, %c3072_315], %341 {strides = array<i32>} : memref<1x1x3x3584xbf16, #tpu.memory_space<vmem>>, vector<1x1x1x128xbf16>,
    %342 = vector.extract_strided_slice %241 {offsets = [25, 0], sizes = [1, 128], strides = [1, 1]} : vector<28x128xbf16> to vector<1x128xbf16>
    %c0_316 = arith.constant 0 : index
    %c0_317 = arith.constant 0 : index
    %c2_318 = arith.constant 2 : index
    %c3200_319 = arith.constant 3200 : index
    %343 = vector.load %arg5[%c0_316, %c0_317, %c2_318, %c3200_319] : memref<1x1x3x3584xbf16, #tpu.memory_space<vmem>>, vector<1x1x1x128xbf16>
    %344 = vector.shape_cast %343 : vector<1x1x1x128xbf16> to vector<1x128xbf16>
    %345 = vector.shape_cast %342 : vector<1x128xbf16> to vector<1x1x1x128xbf16>
    tpu.vector_store %arg5[%c0_316, %c0_317, %c2_318, %c3200_319], %345 {strides = array<i32>} : memref<1x1x3x3584xbf16, #tpu.memory_space<vmem>>, vector<1x1x1x128xbf16>,
    %346 = vector.extract_strided_slice %241 {offsets = [26, 0], sizes = [1, 128], strides = [1, 1]} : vector<28x128xbf16> to vector<1x128xbf16>
    %c0_320 = arith.constant 0 : index
    %c0_321 = arith.constant 0 : index
    %c2_322 = arith.constant 2 : index
    %c3328_323 = arith.constant 3328 : index
    %347 = vector.load %arg5[%c0_320, %c0_321, %c2_322, %c3328_323] : memref<1x1x3x3584xbf16, #tpu.memory_space<vmem>>, vector<1x1x1x128xbf16>
    %348 = vector.shape_cast %347 : vector<1x1x1x128xbf16> to vector<1x128xbf16>
    %349 = vector.shape_cast %346 : vector<1x128xbf16> to vector<1x1x1x128xbf16>
    tpu.vector_store %arg5[%c0_320, %c0_321, %c2_322, %c3328_323], %349 {strides = array<i32>} : memref<1x1x3x3584xbf16, #tpu.memory_space<vmem>>, vector<1x1x1x128xbf16>,
    %350 = vector.extract_strided_slice %241 {offsets = [27, 0], sizes = [1, 128], strides = [1, 1]} : vector<28x128xbf16> to vector<1x128xbf16>
    %c0_324 = arith.constant 0 : index
    %c0_325 = arith.constant 0 : index
    %c2_326 = arith.constant 2 : index
    %c3456_327 = arith.constant 3456 : index
    %351 = vector.load %arg5[%c0_324, %c0_325, %c2_326, %c3456_327] : memref<1x1x3x3584xbf16, #tpu.memory_space<vmem>>, vector<1x1x1x128xbf16>
    %352 = vector.shape_cast %351 : vector<1x1x1x128xbf16> to vector<1x128xbf16>
    %353 = vector.shape_cast %350 : vector<1x128xbf16> to vector<1x1x1x128xbf16>
    tpu.vector_store %arg5[%c0_324, %c0_325, %c2_326, %c3456_327], %353 {strides = array<i32>} : memref<1x1x3x3584xbf16, #tpu.memory_space<vmem>>, vector<1x1x1x128xbf16>,
    return
  }
  func.func @transform_0(%arg0: i32, %arg1: i32) -> (i32, i32, i32, i32) {
    %c0_i32 = arith.constant 0 : i32
    %c0_i32_0 = arith.constant 0 : i32
    %c0_i32_1 = arith.constant 0 : i32
    %c0_i32_2 = arith.constant 0 : i32
    return %arg0, %c0_i32, %c0_i32_0, %c0_i32_1 : i32, i32, i32, i32
  }
  func.func @transform_1(%arg0: i32, %arg1: i32) -> (i32, i32, i32) {
    %c0_i32 = arith.constant 0 : i32
    %c0_i32_0 = arith.constant 0 : i32
    %c0_i32_1 = arith.constant 0 : i32
    return %arg1, %c0_i32, %c0_i32_0 : i32, i32, i32
  }
  func.func @transform_2(%arg0: i32, %arg1: i32) -> (i32, i32) {
    %c0_i32 = arith.constant 0 : i32
    %c0_i32_0 = arith.constant 0 : i32
    %c0_i32_1 = arith.constant 0 : i32
    return %c0_i32, %c0_i32_0 : i32, i32
  }
  func.func @transform_3(%arg0: i32, %arg1: i32) -> (i32, i32, i32, i32) {
    %c0_i32 = arith.constant 0 : i32
    %c0_i32_0 = arith.constant 0 : i32
    %c0_i32_1 = arith.constant 0 : i32
    return %arg0, %arg1, %c0_i32, %c0_i32_0 : i32, i32, i32, i32
  }
}

</mosaic_0001>

<llo_original>
// kernel: tpu_custom_call.1
$region0: #{tpu_custom_call.1}
  #allocation0 [shape = 'u32[]', space=smem, size = 0x4, offset = 0x4, fixed_abs, tag = 'smem constant byte address 0x4 - core index']
  #allocation1 [shape = 'u32[72,128]{1,0:T(1,128)}', space=vmem, size = 0x9000, scoped, tag = 'internal scratch']
  %s0 = inlined_call_operand.vmem [shape: f32[2,3,16,16], index: 0, kind: input, shape index: {}]
  %s1 = inlined_call_operand.vmem [shape: f32[2,28,16], index: 1, kind: input, shape index: {}]
  %s2 = inlined_call_operand.hbm [shape: f32[16,128], index: 2, kind: input, shape index: {}]
  %s3 = inlined_call_operand.vmem [shape: bf16[2,2,3,3584], index: 3, kind: output, shape index: {}]
  %s4 = sld [smem:[#allocation0]]
  $region49: #{tpu_custom_call.1} parent=0
    _
  %s6 = ssub.s32 1, %s4
  %s7 = scalar_select 0, %s6, %s4
  $region1: #{tpu_custom_call.1} parent=0
    #allocation2 [shape = 'u8[8192]{0}', space=vmem, size = 0x2000, scoped, tag = 'input window, operand 2, single buffered']
    #allocation3 [shape = 's32[2]{0}', space=sflag, size = 0x8, scoped, tag = 'scoped memory for tpu_custom_call.1']
    %8 = vsyncpa [#allocation3], 0
    loop: start=0, step=1, limit=6
    $region2: #{tpu_custom_call.1} parent=1 // loop_pre_header
      _
    $region3: #{tpu_custom_call.1} parent=1 // loop_header
      %s10 = sphi 0, %s14
      %p11 = scmp.ge.s32.totalorder %s10, 6
      %s17 = sphi 0, %s29
      %s18 = sphi 0, %s25
      %s19 = sphi 0, %s17
      %s20 = sphi 0, %s18
      %s21 = sphi 0, %s19
      %s22 = sphi 0, %s20
      %s32 = sphi 0, %s34
      %s35 = sphi 0, %s32
      %s36 = sphi 0, %s35
      %s52 = sphi 0, %s36
      %s58 = sphi 0, %s60
      %s61 = sphi 0, %s58
      %s62 = sphi 0, %s61
      %s78 = sphi 0, %s62
      %s82 = sphi 0, %s82
      %s84 = sphi 0, %s82
      %s85 = sphi 0, %s84
      %s99 = sphi 0, %s85
      %s107 = sphi 0, %s109
      %s110 = sphi 0, %s107
      %s111 = sphi 0, %s110
      %s127 = sphi 0, %s111
    $region4: #{tpu_custom_call.1} parent=1 // loop_header_branch
      %13 = sbr.rel (%p11) target = $region8
    $region5: #{tpu_custom_call.1} parent=1 // loop_body
      %s15 = ssub.s32 %s10, 1
      %s16 = ssub.s32 %s10, 2
      %s23 = sadd.s32 1, %s18
      %p24 = scmp.ge.s32.totalorder %s23, 2
      %s25 = scalar_select %p24, 0, %s23
      %s26 = sadd.s32 1, %s17
      %s27 = scalar_select %p24, %s26, %s17
      %p28 = scmp.ge.s32.totalorder %s27, 2
      %s29 = scalar_select %p28, 0, %s27
      %s30 = ssub.s32 %s17, %s29
      %p31 = scmp.eq.s32.totalorder %s30, 0
      %s33 = sadd.s32 %s32, 1
      %s34 = scalar_select %p31, %s32, %s33
      %p37 = pneg %p31
      %p38 = scmp.eq.s32.totalorder %s10, 3
      %p39 = por %p37, %p38
      %p40 = scmp.ne.s32.totalorder %s32, %s35
      %p41 = scmp.eq.s32.totalorder %s10, 0
      %p42 = por %p40, %p41
      %p43 = scmp.ne.s32.totalorder %s32, %s35
      %p44 = scmp.eq.s32.totalorder %s15, 3
      %p45 = por %p43, %p44
      %p46 = scmp.ne.s32.totalorder %s35, %s36
      %p47 = scmp.eq.s32.totalorder %s15, 0
      %p48 = por %p46, %p47
      %p49 = scmp.ne.s32.totalorder %s35, %s36
      %p50 = scmp.eq.s32.totalorder %s16, 3
      %p51 = por %p49, %p50
      %p53 = scmp.ne.s32.totalorder %s36, %s52
      %p54 = scmp.eq.s32.totalorder %s16, 0
      %p55 = por %p53, %p54
      %s56 = ssub.s32 %s18, %s25
      %p57 = scmp.eq.s32.totalorder %s56, 0
      %s59 = sadd.s32 %s58, 1
      %s60 = scalar_select %p57, %s58, %s59
      %p63 = pneg %p57
      %p64 = scmp.eq.s32.totalorder %s10, 3
      %p65 = por %p63, %p64
      %p66 = scmp.ne.s32.totalorder %s58, %s61
      %p67 = scmp.eq.s32.totalorder %s10, 0
      %p68 = por %p66, %p67
      %p69 = scmp.ne.s32.totalorder %s58, %s61
      %p70 = scmp.eq.s32.totalorder %s15, 3
      %p71 = por %p69, %p70
      %p72 = scmp.ne.s32.totalorder %s61, %s62
      %p73 = scmp.eq.s32.totalorder %s15, 0
      %p74 = por %p72, %p73
      %p75 = scmp.ne.s32.totalorder %s61, %s62
      %p76 = scmp.eq.s32.totalorder %s16, 3
      %p77 = por %p75, %p76
      %p79 = scmp.ne.s32.totalorder %s62, %s78
      %p80 = scmp.eq.s32.totalorder %s16, 0
      %p81 = por %p79, %p80
      %s83 = sadd.s32 %s82, 1
      %p86 = scmp.eq.s32.totalorder %s10, 3
      %p87 = scmp.ne.s32.totalorder %s82, %s84
      %p88 = scmp.eq.s32.totalorder %s10, 0
      %p89 = por %p87, %p88
      %p90 = scmp.ne.s32.totalorder %s82, %s84
      %p91 = scmp.eq.s32.totalorder %s15, 3
      %p92 = por %p90, %p91
      %p93 = scmp.ne.s32.totalorder %s84, %s85
      %p94 = scmp.eq.s32.totalorder %s15, 0
      %p95 = por %p93, %p94
      %p96 = scmp.ne.s32.totalorder %s84, %s85
      %p97 = scmp.eq.s32.totalorder %s16, 3
      %p98 = por %p96, %p97
      %p100 = scmp.ne.s32.totalorder %s85, %s99
      %p101 = scmp.eq.s32.totalorder %s16, 0
      %p102 = por %p100, %p101
      %s103 = ssub.s32 %s17, %s29
      %s104 = ssub.s32 %s18, %s25
      %s105 = sor.u32 %s103, %s104
      %p106 = scmp.eq.s32.totalorder %s105, 0
      %s108 = sadd.s32 %s107, 1
      %s109 = scalar_select %p106, %s107, %s108
      %p112 = pneg %p106
      %p113 = scmp.eq.s32.totalorder %s10, 3
      %p114 = por %p112, %p113
      %p115 = scmp.ne.s32.totalorder %s107, %s110
      %p116 = scmp.eq.s32.totalorder %s10, 0
      %p117 = por %p115, %p116
      %p118 = scmp.ne.s32.totalorder %s107, %s110
      %p119 = scmp.eq.s32.totalorder %s15, 3
      %p120 = por %p118, %p119
      %p121 = scmp.ne.s32.totalorder %s110, %s111
      %p122 = scmp.eq.s32.totalorder %s15, 0
      %p123 = por %p121, %p122
      %p124 = scmp.ne.s32.totalorder %s110, %s111
      %p125 = scmp.eq.s32.totalorder %s16, 3
      %p126 = por %p124, %p125
      %p128 = scmp.ne.s32.totalorder %s111, %s127
      %p129 = scmp.eq.s32.totalorder %s16, 0
      %p130 = por %p128, %p129
      %p131 = scmp.le.s32.totalorder 1, %s10
      %p132 = scmp.lt.s32.totalorder %s10, 5
      %p133 = pnand %p131, %p132
      %p134 = pneg %p133
      // Predicated region
      $region9: #{tpu_custom_call.1} parent=5 // pred_check
        _
      $region10: #{tpu_custom_call.1} parent=5 // pred_check_branch
        %136 = sbr.rel (%p133) target = $region12
      $region11: #{tpu_custom_call.1} parent=5 // pred_region
        %s137 = ssub.s32 %s10, 1
        // Predicated region
        $region13: #{tpu_custom_call.1} parent=11 // pred_check
          %p138 = pneg %p95
        $region14: #{tpu_custom_call.1} parent=11 // pred_check_branch
          %140 = sbr.rel (%p138) target = $region16
        $region15: #{tpu_custom_call.1} parent=11 // pred_region
          %142 = vsyncadd [#allocation3], 0
          %s143 = sshll.u32 %s2, 4
          %s144 = int_to_ptr.hbm [resolvable:$true] %s143
          %s145 = sshll.u32 [#allocation2], 4
          %s146 = int_to_ptr.vmem [resolvable:$true] %s145
          %151 = dma.hbm_to_vmem [thread:$0]  %s144, 256, %s146, [#allocation3], 128, 128, 8
        $region16: #{tpu_custom_call.1} parent=11 // pred_fallthru
          _
      $region12: #{tpu_custom_call.1} parent=5 // pred_fallthru
        _
      %p152 = scmp.lt.s32.totalorder %s10, 4
      // Predicated region
      $region17: #{tpu_custom_call.1} parent=5 // pred_check
        %p153 = pneg %p152
      $region18: #{tpu_custom_call.1} parent=5 // pred_check_branch
        %155 = sbr.rel (%p153) target = $region20
      $region19: #{tpu_custom_call.1} parent=5 // pred_region
        // Predicated region
        $region21: #{tpu_custom_call.1} parent=19 // pred_check
          %p156 = pneg %p42
        $region22: #{tpu_custom_call.1} parent=19 // pred_check_branch
          %158 = sbr.rel (%p156) target = $region24
        $region23: #{tpu_custom_call.1} parent=19 // pred_region
          %p159 = scmp.lt.s32.totalorder %s17, 1
          %s160 = scalar_select %p159, %s17, 1
          %s161 = smul.addr %s160, 6
          %s162 = smul.addr %s161, 8
          %s163 = scalar_lea.vmem %s0, %s162
        $region24: #{tpu_custom_call.1} parent=19 // pred_fallthru
          _
        // Predicated region
        $region25: #{tpu_custom_call.1} parent=19 // pred_check
          %p164 = pneg %p68
        $region26: #{tpu_custom_call.1} parent=19 // pred_check_branch
          %166 = sbr.rel (%p164) target = $region28
        $region27: #{tpu_custom_call.1} parent=19 // pred_region
          %p167 = scmp.lt.s32.totalorder %s18, 1
          %s168 = scalar_select %p167, %s18, 1
          %s169 = smul.addr %s168, 4
          %s170 = smul.addr %s169, 8
          %s171 = scalar_lea.vmem %s1, %s170
        $region28: #{tpu_custom_call.1} parent=19 // pred_fallthru
          _
      $region20: #{tpu_custom_call.1} parent=5 // pred_fallthru
        _
      %p172 = scmp.le.s32.totalorder 1, %s10
      %p173 = scmp.lt.s32.totalorder %s10, 5
      %p174 = pnand %p172, %p173
      %p175 = pneg %p174
      // Predicated region
      $region29: #{tpu_custom_call.1} parent=5 // pred_check
        _
      $region30: #{tpu_custom_call.1} parent=5 // pred_check_branch
        %177 = sbr.rel (%p174) target = $region32
      $region31: #{tpu_custom_call.1} parent=5 // pred_region
        %s178 = ssub.s32 %s10, 1
        // Predicated region
        $region33: #{tpu_custom_call.1} parent=31 // pred_check
          %p179 = pneg %p95
        $region34: #{tpu_custom_call.1} parent=31 // pred_check_branch
          %181 = sbr.rel (%p179) target = $region36
        $region35: #{tpu_custom_call.1} parent=31 // pred_region
          %183 = dma.done [#allocation3], 256
        $region36: #{tpu_custom_call.1} parent=31 // pred_fallthru
          _
        %p184 = scmp.lt.s32.totalorder %s19, 1
        %s185 = scalar_select %p184, %s19, 1
        %s186 = smul.addr %s185, 6
        %s187 = smul.addr %s186, 8
        %s188 = scalar_lea.vmem %s0, %s187
        %p189 = pneg %p48
        %p190 = pneg %p45
        %p191 = scmp.lt.s32.totalorder %s20, 1
        %s192 = scalar_select %p191, %s20, 1
        %s193 = smul.addr %s192, 4
        %s194 = smul.addr %s193, 8
        %s195 = scalar_lea.vmem %s1, %s194
        %p196 = pneg %p74
        %p197 = pneg %p71
        %p198 = pneg %p95
        %p199 = pneg %p92
        %p200 = pneg %p123
        %p201 = pneg %p120
        %p202 = scmp.lt.s32.totalorder %s19, 1
        %s203 = scalar_select %p202, %s19, 1
        %p204 = scmp.lt.s32.totalorder %s20, 1
        %s205 = scalar_select %p204, %s20, 1
        %s206 = smul.addr %s205, 28
        %s207 = smul.addr %s203, 56
        %s208 = sadd.s32 %s206, %s207
        %s209 = smul.addr %s208, 2
        %s210 = scalar_lea.vmem %s3, %s209
        %p211 = scmp.lt.s32.totalorder %s19, 1
        %s212 = scalar_select %p211, %s19, 1
        %s213 = smul.addr %s212, 6
        %s214 = smul.addr %s213, 8
        %s215 = scalar_lea.vmem %s0, %s214
        %p216 = scmp.lt.s32.totalorder %s20, 1
        %s217 = scalar_select %p216, %s20, 1
        %s218 = smul.addr %s217, 4
        %s219 = smul.addr %s218, 8
        %s220 = scalar_lea.vmem %s1, %s219
        %p221 = scmp.lt.s32.totalorder %s19, 1
        %s222 = scalar_select %p221, %s19, 1
        %p223 = scmp.lt.s32.totalorder %s20, 1
        %s224 = scalar_select %p223, %s20, 1
        %s225 = smul.addr %s224, 28
        %s226 = smul.addr %s222, 56
        %s227 = sadd.s32 %s225, %s226
        %s228 = smul.addr %s227, 2
        %s229 = scalar_lea.vmem %s3, %s228
        %v230 = vld [vmem:[%s220] sm:$0xff]
        %v231 = vld [vmem:[%s220 + $0x8] sm:$0xff]
        %v232 = vld [vmem:[%s220 + $0x10] sm:$0xff]
        %v233 = vld [vmem:[%s220 + $0x18] sm:$0xf]
        %v234 = vld [vmem:[#allocation2] sm:$0xff]
        %v235 = vld [vmem:[#allocation2 + $0x8] sm:$0xff]
        %v236 = vld [vmem:[%s215] sm:$0xff]
        %v237 = vld [vmem:[%s215 + $0x8] sm:$0xff]
        %vm238 = vcmask 130048
        %v240 = vsel %vm238, %v236, 0
        %v243 = vsel %vm238, %v237, 0
        %245 = vmatpush.msra.mxu0 0.0
        %246 = vmatpush.msra.mxu0 0.0
        %247 = vmatpush.msra.mxu0 0.0
        %248 = vmatpush.msra.mxu0 0.0
        %249 = vmatpush.msra.mxu0 0.0
        %250 = vmatpush.msra.mxu0 0.0
        %251 = vmatpush.msra.mxu0 0.0
        %252 = vmatpush.msra.mxu0 0.0
        %253 = vmatpush.msra.mxu0 0.0
        %254 = vmatpush.msra.mxu0 0.0
        %255 = vmatpush.msra.mxu0 0.0
        %256 = vmatpush.msra.mxu0 0.0
        %257 = vmatpush.msra.mxu0 0.0
        %258 = vmatpush.msra.mxu0 0.0
        %259 = vmatpush.msra.mxu0 %v235
        %260 = vmatpush.msra.mxu0 %v234
        %261 = vmatmul.f32.gmra.mxu0 %v240
        %v262 = vpop.f32.mrf.mxu0
        %v263 = vadd.f32 0.0, %v262
        %264 = vmatmul.f32.gmra.mxu0 %v243
        %v265 = vpop.f32.mrf.mxu0
        %v266 = vadd.f32 0.0, %v265
        %267 = vdwg.mxu0
        %v269 = vsel %vm238, %v230, 0
        %v272 = vsel %vm238, %v231, 0
        %v275 = vsel %vm238, %v232, 0
        %v278 = vsel %vm238, %v233, 0
        %280 = vmatpush.msra.mxu0 0.0
        %281 = vmatpush.msra.mxu0 0.0
        %282 = vmatpush.msra.mxu0 0.0
        %283 = vmatpush.msra.mxu0 0.0
        %284 = vmatpush.msra.mxu0 0.0
        %285 = vmatpush.msra.mxu0 0.0
        %286 = vmatpush.msra.mxu0 0.0
        %287 = vmatpush.msra.mxu0 0.0
        %288 = vmatpush.msra.mxu0 0.0
        %289 = vmatpush.msra.mxu0 0.0
        %290 = vmatpush.msra.mxu0 0.0
        %291 = vmatpush.msra.mxu0 0.0
        %292 = vmatpush.msra.mxu0 0.0
        %293 = vmatpush.msra.mxu0 0.0
        %294 = vmatpush.msra.mxu0 %v266
        %295 = vmatpush.msra.mxu0 %v263
        %296 = vmatmul.f32.gmra.mxu0 %v269
        %v297 = vpop.f32.mrf.mxu0
        %v298 = vadd.f32 0.0, %v297
        %299 = vmatmul.f32.gmra.mxu0 %v272
        %v300 = vpop.f32.mrf.mxu0
        %v301 = vadd.f32 0.0, %v300
        %302 = vmatmul.f32.gmra.mxu0 %v275
        %v303 = vpop.f32.mrf.mxu0
        %v304 = vadd.f32 0.0, %v303
        %305 = vmatmul.f32.gmra.mxu0 %v278
        %v306 = vpop.f32.mrf.mxu0
        %v307 = vadd.f32 0.0, %v306
        %308 = vdwg.mxu0
        %v309 = vpack.c.bf16 %v298, %v298
        %v310 = vpack.c.bf16 %v301, %v301
        %v311 = vpack.c.bf16 %v304, %v304
        %v312 = vpack.c.bf16 %v307, %v307
        %vm313 = vcmask 1040384
        %vm314 = vsmask.f32 256
        %vm315 = vmand %vm313, %vm314
        %v316 = vld [vmem:[%s229] sm:$0x1]
        %v317 = vsel %vm315, %v309, %v316
        %318 = vst [vmem:[%s229] sm:$0x1] %v317
        %v320 = vrot.slane %v309, 2
        %vm321 = vcmask 1041408
        %v324 = vsel %vm321, %v309, %v320
        %v325 = vshrl.u32 %v324, 16
        %v327 = vrot.slane %v325, 6
        %v328 = vrot.slane %v327, 2
        %v330 = vld [vmem:[%s229 + $0x2] sm:$0x1]
        %v331 = vsel %vm315, %v328, %v330
        %332 = vst [vmem:[%s229 + $0x2] sm:$0x1] %v331
        %v334 = vrot.slane %v324, 7
        %v335 = vrot.slane %v334, 2
        %v337 = vld [vmem:[%s229 + $0x4] sm:$0x1]
        %v338 = vsel %vm315, %v335, %v337
        %339 = vst [vmem:[%s229 + $0x4] sm:$0x1] %v338
        %v340 = vrot.slane %v325, 7
        %v341 = vrot.slane %v340, 2
        %v343 = vld [vmem:[%s229 + $0x6] sm:$0x1]
        %v344 = vsel %vm315, %v341, %v343
        %345 = vst [vmem:[%s229 + $0x6] sm:$0x1] %v344
        %346 = vst.sshfl [vmem:[#allocation1] sm:$0xff pattern:$0x75643120] %v309
        %s347 = scalar_lea.vmem [#allocation1], 1
        %v348 = vld [vmem:[%s347] ss:$2 sm:$0xff]
        %v350 = vld [vmem:[%s229 + $0x8] sm:$0x1]
        %v351 = vsel %vm315, %v348, %v350
        %352 = vst [vmem:[%s229 + $0x8] sm:$0x1] %v351
        %353 = vst.sshfl [vmem:[#allocation1] sm:$0xff pattern:$0x75643120] %v309
        %s354 = scalar_lea.vmem [#allocation1], 1
        %v355 = vld [vmem:[%s354] ss:$2 sm:$0xff]
        %v356 = vshrl.u32 %v355, 16
        %v358 = vrot.slane %v356, 6
        %v359 = vrot.slane %v358, 2
        %v361 = vld [vmem:[%s229 + $0xa] sm:$0x1]
        %v362 = vsel %vm315, %v359, %v361
        %363 = vst [vmem:[%s229 + $0xa] sm:$0x1] %v362
        %364 = vst.sshfl [vmem:[#allocation1] sm:$0xff pattern:$0x75643120] %v309
        %s365 = scalar_lea.vmem [#allocation1], 1
        %v366 = vld [vmem:[%s365] ss:$2 sm:$0xff]
        %v368 = vrot.slane %v366, 7
        %v369 = vrot.slane %v368, 2
        %v371 = vld [vmem:[%s229 + $0xc] sm:$0x1]
        %v372 = vsel %vm315, %v369, %v371
        %373 = vst [vmem:[%s229 + $0xc] sm:$0x1] %v372
        %374 = vst.sshfl [vmem:[#allocation1] sm:$0xff pattern:$0x75643120] %v309
        %s375 = scalar_lea.vmem [#allocation1], 1
        %v376 = vld [vmem:[%s375] ss:$2 sm:$0xff]
        %v377 = vshrl.u32 %v376, 16
        %v379 = vrot.slane %v377, 7
        %v380 = vrot.slane %v379, 2
        %v382 = vld [vmem:[%s229 + $0xe] sm:$0x1]
        %v383 = vsel %vm315, %v380, %v382
        %384 = vst [vmem:[%s229 + $0xe] sm:$0x1] %v383
        %v385 = vld [vmem:[%s229 + $0x10] sm:$0x1]
        %v386 = vsel %vm315, %v310, %v385
        %387 = vst [vmem:[%s229 + $0x10] sm:$0x1] %v386
        %v389 = vrot.slane %v310, 2
        %v392 = vsel %vm321, %v310, %v389
        %v393 = vshrl.u32 %v392, 16
        %v395 = vrot.slane %v393, 6
        %v396 = vrot.slane %v395, 2
        %v398 = vld [vmem:[%s229 + $0x12] sm:$0x1]
        %v399 = vsel %vm315, %v396, %v398
        %400 = vst [vmem:[%s229 + $0x12] sm:$0x1] %v399
        %v402 = vrot.slane %v392, 7
        %v403 = vrot.slane %v402, 2
        %v405 = vld [vmem:[%s229 + $0x14] sm:$0x1]
        %v406 = vsel %vm315, %v403, %v405
        %407 = vst [vmem:[%s229 + $0x14] sm:$0x1] %v406
        %v408 = vrot.slane %v393, 7
        %v409 = vrot.slane %v408, 2
        %v411 = vld [vmem:[%s229 + $0x16] sm:$0x1]
        %v412 = vsel %vm315, %v409, %v411
        %413 = vst [vmem:[%s229 + $0x16] sm:$0x1] %v412
        %414 = vst.sshfl [vmem:[#allocation1] sm:$0xff pattern:$0x75643120] %v310
        %s415 = scalar_lea.vmem [#allocation1], 1
        %v416 = vld [vmem:[%s415] ss:$2 sm:$0xff]
        %v418 = vld [vmem:[%s229 + $0x18] sm:$0x1]
        %v419 = vsel %vm315, %v416, %v418
        %420 = vst [vmem:[%s229 + $0x18] sm:$0x1] %v419
        %421 = vst.sshfl [vmem:[#allocation1] sm:$0xff pattern:$0x75643120] %v310
        %s422 = scalar_lea.vmem [#allocation1], 1
        %v423 = vld [vmem:[%s422] ss:$2 sm:$0xff]
        %v424 = vshrl.u32 %v423, 16
        %v426 = vrot.slane %v424, 6
        %v427 = vrot.slane %v426, 2
        %v429 = vld [vmem:[%s229 + $0x1a] sm:$0x1]
        %v430 = vsel %vm315, %v427, %v429
        %431 = vst [vmem:[%s229 + $0x1a] sm:$0x1] %v430
        %432 = vst.sshfl [vmem:[#allocation1] sm:$0xff pattern:$0x75643120] %v310
        %s433 = scalar_lea.vmem [#allocation1], 1
        %v434 = vld [vmem:[%s433] ss:$2 sm:$0xff]
        %v436 = vrot.slane %v434, 7
        %v437 = vrot.slane %v436, 2
        %v439 = vld [vmem:[%s229 + $0x1c] sm:$0x1]
        %v440 = vsel %vm315, %v437, %v439
        %441 = vst [vmem:[%s229 + $0x1c] sm:$0x1] %v440
        %442 = vst.sshfl [vmem:[#allocation1] sm:$0xff pattern:$0x75643120] %v310
        %s443 = scalar_lea.vmem [#allocation1], 1
        %v444 = vld [vmem:[%s443] ss:$2 sm:$0xff]
        %v445 = vshrl.u32 %v444, 16
        %v447 = vrot.slane %v445, 7
        %v448 = vrot.slane %v447, 2
        %v450 = vld [vmem:[%s229 + $0x1e] sm:$0x1]
        %v451 = vsel %vm315, %v448, %v450
        %452 = vst [vmem:[%s229 + $0x1e] sm:$0x1] %v451
        %v453 = vld [vmem:[%s229 + $0x20] sm:$0x1]
        %v454 = vsel %vm315, %v311, %v453
        %455 = vst [vmem:[%s229 + $0x20] sm:$0x1] %v454
        %v457 = vrot.slane %v311, 2
        %v460 = vsel %vm321, %v311, %v457
        %v461 = vshrl.u32 %v460, 16
        %v463 = vrot.slane %v461, 6
        %v464 = vrot.slane %v463, 2
        %v466 = vld [vmem:[%s229 + $0x22] sm:$0x1]
        %v467 = vsel %vm315, %v464, %v466
        %468 = vst [vmem:[%s229 + $0x22] sm:$0x1] %v467
        %v470 = vrot.slane %v460, 7
        %v471 = vrot.slane %v470, 2
        %v473 = vld [vmem:[%s229 + $0x24] sm:$0x1]
        %v474 = vsel %vm315, %v471, %v473
        %475 = vst [vmem:[%s229 + $0x24] sm:$0x1] %v474
        %v476 = vrot.slane %v461, 7
        %v477 = vrot.slane %v476, 2
        %v479 = vld [vmem:[%s229 + $0x26] sm:$0x1]
        %v480 = vsel %vm315, %v477, %v479
        %481 = vst [vmem:[%s229 + $0x26] sm:$0x1] %v480
        %482 = vst.sshfl [vmem:[#allocation1] sm:$0xff pattern:$0x75643120] %v311
        %s483 = scalar_lea.vmem [#allocation1], 1
        %v484 = vld [vmem:[%s483] ss:$2 sm:$0xff]
        %v486 = vld [vmem:[%s229 + $0x28] sm:$0x1]
        %v487 = vsel %vm315, %v484, %v486
        %488 = vst [vmem:[%s229 + $0x28] sm:$0x1] %v487
        %489 = vst.sshfl [vmem:[#allocation1] sm:$0xff pattern:$0x75643120] %v311
        %s490 = scalar_lea.vmem [#allocation1], 1
        %v491 = vld [vmem:[%s490] ss:$2 sm:$0xff]
        %v492 = vshrl.u32 %v491, 16
        %v494 = vrot.slane %v492, 6
        %v495 = vrot.slane %v494, 2
        %v497 = vld [vmem:[%s229 + $0x2a] sm:$0x1]
        %v498 = vsel %vm315, %v495, %v497
        %499 = vst [vmem:[%s229 + $0x2a] sm:$0x1] %v498
        %500 = vst.sshfl [vmem:[#allocation1] sm:$0xff pattern:$0x75643120] %v311
        %s501 = scalar_lea.vmem [#allocation1], 1
        %v502 = vld [vmem:[%s501] ss:$2 sm:$0xff]
        %v504 = vrot.slane %v502, 7
        %v505 = vrot.slane %v504, 2
        %v507 = vld [vmem:[%s229 + $0x2c] sm:$0x1]
        %v508 = vsel %vm315, %v505, %v507
        %509 = vst [vmem:[%s229 + $0x2c] sm:$0x1] %v508
        %510 = vst.sshfl [vmem:[#allocation1] sm:$0xff pattern:$0x75643120] %v311
        %s511 = scalar_lea.vmem [#allocation1], 1
        %v512 = vld [vmem:[%s511] ss:$2 sm:$0xff]
        %v513 = vshrl.u32 %v512, 16
        %v515 = vrot.slane %v513, 7
        %v516 = vrot.slane %v515, 2
        %v518 = vld [vmem:[%s229 + $0x2e] sm:$0x1]
        %v519 = vsel %vm315, %v516, %v518
        %520 = vst [vmem:[%s229 + $0x2e] sm:$0x1] %v519
        %v521 = vld [vmem:[%s229 + $0x30] sm:$0x1]
        %v522 = vsel %vm315, %v312, %v521
        %523 = vst [vmem:[%s229 + $0x30] sm:$0x1] %v522
        %v525 = vrot.slane %v312, 2
        %v528 = vsel %vm321, %v312, %v525
        %v529 = vshrl.u32 %v528, 16
        %v531 = vrot.slane %v529, 6
        %v532 = vrot.slane %v531, 2
        %v534 = vld [vmem:[%s229 + $0x32] sm:$0x1]
        %v535 = vsel %vm315, %v532, %v534
        %536 = vst [vmem:[%s229 + $0x32] sm:$0x1] %v535
        %v538 = vrot.slane %v528, 7
        %v539 = vrot.slane %v538, 2
        %v541 = vld [vmem:[%s229 + $0x34] sm:$0x1]
        %v542 = vsel %vm315, %v539, %v541
        %543 = vst [vmem:[%s229 + $0x34] sm:$0x1] %v542
        %v544 = vrot.slane %v529, 7
        %v545 = vrot.slane %v544, 2
        %v547 = vld [vmem:[%s229 + $0x36] sm:$0x1]
        %v548 = vsel %vm315, %v545, %v547
        %549 = vst [vmem:[%s229 + $0x36] sm:$0x1] %v548
        %s550 = scalar_lea.vmem %s215, 16
        %v551 = vld [vmem:[%s550] sm:$0xff]
        %v552 = vld [vmem:[%s550 + $0x8] sm:$0xff]
        %v554 = vsel %vm238, %v551, 0
        %v557 = vsel %vm238, %v552, 0
        %559 = vmatpush.msra.mxu0 0.0
        %560 = vmatpush.msra.mxu0 0.0
        %561 = vmatpush.msra.mxu0 0.0
        %562 = vmatpush.msra.mxu0 0.0
        %563 = vmatpush.msra.mxu0 0.0
        %564 = vmatpush.msra.mxu0 0.0
        %565 = vmatpush.msra.mxu0 0.0
        %566 = vmatpush.msra.mxu0 0.0
        %567 = vmatpush.msra.mxu0 0.0
        %568 = vmatpush.msra.mxu0 0.0
        %569 = vmatpush.msra.mxu0 0.0
        %570 = vmatpush.msra.mxu0 0.0
        %571 = vmatpush.msra.mxu0 0.0
        %572 = vmatpush.msra.mxu0 0.0
        %573 = vmatpush.msra.mxu0 %v235
        %574 = vmatpush.msra.mxu0 %v234
        %575 = vmatmul.f32.gmra.mxu0 %v554
        %v576 = vpop.f32.mrf.mxu0
        %v577 = vadd.f32 0.0, %v576
        %578 = vmatmul.f32.gmra.mxu0 %v557
        %v579 = vpop.f32.mrf.mxu0
        %v580 = vadd.f32 0.0, %v579
        %581 = vdwg.mxu0
        %582 = vmatpush.msra.mxu0 0.0
        %583 = vmatpush.msra.mxu0 0.0
        %584 = vmatpush.msra.mxu0 0.0
        %585 = vmatpush.msra.mxu0 0.0
        %586 = vmatpush.msra.mxu0 0.0
        %587 = vmatpush.msra.mxu0 0.0
        %588 = vmatpush.msra.mxu0 0.0
        %589 = vmatpush.msra.mxu0 0.0
        %590 = vmatpush.msra.mxu0 0.0
        %591 = vmatpush.msra.mxu0 0.0
        %592 = vmatpush.msra.mxu0 0.0
        %593 = vmatpush.msra.mxu0 0.0
        %594 = vmatpush.msra.mxu0 0.0
        %595 = vmatpush.msra.mxu0 0.0
        %596 = vmatpush.msra.mxu0 %v580
        %597 = vmatpush.msra.mxu0 %v577
        %598 = vmatmul.f32.gmra.mxu0 %v269
        %v599 = vpop.f32.mrf.mxu0
        %v600 = vadd.f32 0.0, %v599
        %601 = vmatmul.f32.gmra.mxu0 %v272
        %v602 = vpop.f32.mrf.mxu0
        %v603 = vadd.f32 0.0, %v602
        %604 = vmatmul.f32.gmra.mxu0 %v275
        %v605 = vpop.f32.mrf.mxu0
        %v606 = vadd.f32 0.0, %v605
        %607 = vmatmul.f32.gmra.mxu0 %v278
        %v608 = vpop.f32.mrf.mxu0
        %v609 = vadd.f32 0.0, %v608
        %610 = vdwg.mxu0
        %v611 = vpack.c.bf16 %v600, %v600
        %v612 = vpack.c.bf16 %v603, %v603
        %v613 = vpack.c.bf16 %v606, %v606
        %v614 = vpack.c.bf16 %v609, %v609
        %v616 = vrot.slane %v611, 2
        %v619 = vsel %vm321, %v611, %v616
        %v620 = vshll.u32 %v619, 16
        %vm623 = vsmask.f32 7938
        %vm624 = vmand %vm313, %vm623
        %v625 = vld [vmem:[%s229] sm:$0x1]
        %v626 = vsel %vm624, %v620, %v625
        %627 = vst [vmem:[%s229] sm:$0x1] %v626
        %v628 = vld [vmem:[%s229 + $0x2] sm:$0x1]
        %v629 = vsel %vm624, %v611, %v628
        %630 = vst [vmem:[%s229 + $0x2] sm:$0x1] %v629
        %v631 = vrot.slane %v620, 7
        %v632 = vrot.slane %v631, 2
        %v634 = vld [vmem:[%s229 + $0x4] sm:$0x1]
        %v635 = vsel %vm624, %v632, %v634
        %636 = vst [vmem:[%s229 + $0x4] sm:$0x1] %v635
        %v638 = vrot.slane %v619, 7
        %v639 = vrot.slane %v638, 2
        %v641 = vld [vmem:[%s229 + $0x6] sm:$0x1]
        %v642 = vsel %vm624, %v639, %v641
        %643 = vst [vmem:[%s229 + $0x6] sm:$0x1] %v642
        %644 = vst.sshfl [vmem:[#allocation1] sm:$0xff pattern:$0x75643120] %v611
        %s645 = scalar_lea.vmem [#allocation1], 1
        %v646 = vld [vmem:[%s645] ss:$2 sm:$0xff]
        %v647 = vshll.u32 %v646, 16
        %v650 = vld [vmem:[%s229 + $0x8] sm:$0x1]
        %v651 = vsel %vm624, %v647, %v650
        %652 = vst [vmem:[%s229 + $0x8] sm:$0x1] %v651
        %653 = vst.sshfl [vmem:[#allocation1] sm:$0xff pattern:$0x75643120] %v611
        %s654 = scalar_lea.vmem [#allocation1], 1
        %v655 = vld [vmem:[%s654] ss:$2 sm:$0xff]
        %v657 = vld [vmem:[%s229 + $0xa] sm:$0x1]
        %v658 = vsel %vm624, %v655, %v657
        %659 = vst [vmem:[%s229 + $0xa] sm:$0x1] %v658
        %660 = vst.sshfl [vmem:[#allocation1] sm:$0xff pattern:$0x75643120] %v611
        %s661 = scalar_lea.vmem [#allocation1], 1
        %v662 = vld [vmem:[%s661] ss:$2 sm:$0xff]
        %v663 = vshll.u32 %v662, 16
        %v665 = vrot.slane %v663, 7
        %v666 = vrot.slane %v665, 2
        %v668 = vld [vmem:[%s229 + $0xc] sm:$0x1]
        %v669 = vsel %vm624, %v666, %v668
        %670 = vst [vmem:[%s229 + $0xc] sm:$0x1] %v669
        %671 = vst.sshfl [vmem:[#allocation1] sm:$0xff pattern:$0x75643120] %v611
        %s672 = scalar_lea.vmem [#allocation1], 1
        %v673 = vld [vmem:[%s672] ss:$2 sm:$0xff]
        %v675 = vrot.slane %v673, 7
        %v676 = vrot.slane %v675, 2
        %v678 = vld [vmem:[%s229 + $0xe] sm:$0x1]
        %v679 = vsel %vm624, %v676, %v678
        %680 = vst [vmem:[%s229 + $0xe] sm:$0x1] %v679
        %v682 = vrot.slane %v612, 2
        %v685 = vsel %vm321, %v612, %v682
        %v686 = vshll.u32 %v685, 16
        %v689 = vld [vmem:[%s229 + $0x10] sm:$0x1]
        %v690 = vsel %vm624, %v686, %v689
        %691 = vst [vmem:[%s229 + $0x10] sm:$0x1] %v690
        %v692 = vld [vmem:[%s229 + $0x12] sm:$0x1]
        %v693 = vsel %vm624, %v612, %v692
        %694 = vst [vmem:[%s229 + $0x12] sm:$0x1] %v693
        %v695 = vrot.slane %v686, 7
        %v696 = vrot.slane %v695, 2
        %v698 = vld [vmem:[%s229 + $0x14] sm:$0x1]
        %v699 = vsel %vm624, %v696, %v698
        %700 = vst [vmem:[%s229 + $0x14] sm:$0x1] %v699
        %v702 = vrot.slane %v685, 7
        %v703 = vrot.slane %v702, 2
        %v705 = vld [vmem:[%s229 + $0x16] sm:$0x1]
        %v706 = vsel %vm624, %v703, %v705
        %707 = vst [vmem:[%s229 + $0x16] sm:$0x1] %v706
        %708 = vst.sshfl [vmem:[#allocation1] sm:$0xff pattern:$0x75643120] %v612
        %s709 = scalar_lea.vmem [#allocation1], 1
        %v710 = vld [vmem:[%s709] ss:$2 sm:$0xff]
        %v711 = vshll.u32 %v710, 16
        %v714 = vld [vmem:[%s229 + $0x18] sm:$0x1]
        %v715 = vsel %vm624, %v711, %v714
        %716 = vst [vmem:[%s229 + $0x18] sm:$0x1] %v715
        %717 = vst.sshfl [vmem:[#allocation1] sm:$0xff pattern:$0x75643120] %v612
        %s718 = scalar_lea.vmem [#allocation1], 1
        %v719 = vld [vmem:[%s718] ss:$2 sm:$0xff]
        %v721 = vld [vmem:[%s229 + $0x1a] sm:$0x1]
        %v722 = vsel %vm624, %v719, %v721
        %723 = vst [vmem:[%s229 + $0x1a] sm:$0x1] %v722
        %724 = vst.sshfl [vmem:[#allocation1] sm:$0xff pattern:$0x75643120] %v612
        %s725 = scalar_lea.vmem [#allocation1], 1
        %v726 = vld [vmem:[%s725] ss:$2 sm:$0xff]
        %v727 = vshll.u32 %v726, 16
        %v729 = vrot.slane %v727, 7
        %v730 = vrot.slane %v729, 2
        %v732 = vld [vmem:[%s229 + $0x1c] sm:$0x1]
        %v733 = vsel %vm624, %v730, %v732
        %734 = vst [vmem:[%s229 + $0x1c] sm:$0x1] %v733
        %735 = vst.sshfl [vmem:[#allocation1] sm:$0xff pattern:$0x75643120] %v612
        %s736 = scalar_lea.vmem [#allocation1], 1
        %v737 = vld [vmem:[%s736] ss:$2 sm:$0xff]
        %v739 = vrot.slane %v737, 7
        %v740 = vrot.slane %v739, 2
        %v742 = vld [vmem:[%s229 + $0x1e] sm:$0x1]
        %v743 = vsel %vm624, %v740, %v742
        %744 = vst [vmem:[%s229 + $0x1e] sm:$0x1] %v743
        %v746 = vrot.slane %v613, 2
        %v749 = vsel %vm321, %v613, %v746
        %v750 = vshll.u32 %v749, 16
        %v753 = vld [vmem:[%s229 + $0x20] sm:$0x1]
        %v754 = vsel %vm624, %v750, %v753
        %755 = vst [vmem:[%s229 + $0x20] sm:$0x1] %v754
        %v756 = vld [vmem:[%s229 + $0x22] sm:$0x1]
        %v757 = vsel %vm624, %v613, %v756
        %758 = vst [vmem:[%s229 + $0x22] sm:$0x1] %v757
        %v759 = vrot.slane %v750, 7
        %v760 = vrot.slane %v759, 2
        %v762 = vld [vmem:[%s229 + $0x24] sm:$0x1]
        %v763 = vsel %vm624, %v760, %v762
        %764 = vst [vmem:[%s229 + $0x24] sm:$0x1] %v763
        %v766 = vrot.slane %v749, 7
        %v767 = vrot.slane %v766, 2
        %v769 = vld [vmem:[%s229 + $0x26] sm:$0x1]
        %v770 = vsel %vm624, %v767, %v769
        %771 = vst [vmem:[%s229 + $0x26] sm:$0x1] %v770
        %772 = vst.sshfl [vmem:[#allocation1] sm:$0xff pattern:$0x75643120] %v613
        %s773 = scalar_lea.vmem [#allocation1], 1
        %v774 = vld [vmem:[%s773] ss:$2 sm:$0xff]
        %v775 = vshll.u32 %v774, 16
        %v778 = vld [vmem:[%s229 + $0x28] sm:$0x1]
        %v779 = vsel %vm624, %v775, %v778
        %780 = vst [vmem:[%s229 + $0x28] sm:$0x1] %v779
        %781 = vst.sshfl [vmem:[#allocation1] sm:$0xff pattern:$0x75643120] %v613
        %s782 = scalar_lea.vmem [#allocation1], 1
        %v783 = vld [vmem:[%s782] ss:$2 sm:$0xff]
        %v785 = vld [vmem:[%s229 + $0x2a] sm:$0x1]
        %v786 = vsel %vm624, %v783, %v785
        %787 = vst [vmem:[%s229 + $0x2a] sm:$0x1] %v786
        %788 = vst.sshfl [vmem:[#allocation1] sm:$0xff pattern:$0x75643120] %v613
        %s789 = scalar_lea.vmem [#allocation1], 1
        %v790 = vld [vmem:[%s789] ss:$2 sm:$0xff]
        %v791 = vshll.u32 %v790, 16
        %v793 = vrot.slane %v791, 7
        %v794 = vrot.slane %v793, 2
        %v796 = vld [vmem:[%s229 + $0x2c] sm:$0x1]
        %v797 = vsel %vm624, %v794, %v796
        %798 = vst [vmem:[%s229 + $0x2c] sm:$0x1] %v797
        %799 = vst.sshfl [vmem:[#allocation1] sm:$0xff pattern:$0x75643120] %v613
        %s800 = scalar_lea.vmem [#allocation1], 1
        %v801 = vld [vmem:[%s800] ss:$2 sm:$0xff]
        %v803 = vrot.slane %v801, 7
        %v804 = vrot.slane %v803, 2
        %v806 = vld [vmem:[%s229 + $0x2e] sm:$0x1]
        %v807 = vsel %vm624, %v804, %v806
        %808 = vst [vmem:[%s229 + $0x2e] sm:$0x1] %v807
        %v810 = vrot.slane %v614, 2
        %v813 = vsel %vm321, %v614, %v810
        %v814 = vshll.u32 %v813, 16
        %v817 = vld [vmem:[%s229 + $0x30] sm:$0x1]
        %v818 = vsel %vm624, %v814, %v817
        %819 = vst [vmem:[%s229 + $0x30] sm:$0x1] %v818
        %v820 = vld [vmem:[%s229 + $0x32] sm:$0x1]
        %v821 = vsel %vm624, %v614, %v820
        %822 = vst [vmem:[%s229 + $0x32] sm:$0x1] %v821
        %v823 = vrot.slane %v814, 7
        %v824 = vrot.slane %v823, 2
        %v826 = vld [vmem:[%s229 + $0x34] sm:$0x1]
        %v827 = vsel %vm624, %v824, %v826
        %828 = vst [vmem:[%s229 + $0x34] sm:$0x1] %v827
        %v830 = vrot.slane %v813, 7
        %v831 = vrot.slane %v830, 2
        %v833 = vld [vmem:[%s229 + $0x36] sm:$0x1]
        %v834 = vsel %vm624, %v831, %v833
        %835 = vst [vmem:[%s229 + $0x36] sm:$0x1] %v834
        %s836 = scalar_lea.vmem %s215, 32
        %v837 = vld [vmem:[%s836] sm:$0xff]
        %v838 = vld [vmem:[%s836 + $0x8] sm:$0xff]
        %v840 = vsel %vm238, %v837, 0
        %v843 = vsel %vm238, %v838, 0
        %845 = vmatpush.msra.mxu0 0.0
        %846 = vmatpush.msra.mxu0 0.0
        %847 = vmatpush.msra.mxu0 0.0
        %848 = vmatpush.msra.mxu0 0.0
        %849 = vmatpush.msra.mxu0 0.0
        %850 = vmatpush.msra.mxu0 0.0
        %851 = vmatpush.msra.mxu0 0.0
        %852 = vmatpush.msra.mxu0 0.0
        %853 = vmatpush.msra.mxu0 0.0
        %854 = vmatpush.msra.mxu0 0.0
        %855 = vmatpush.msra.mxu0 0.0
        %856 = vmatpush.msra.mxu0 0.0
        %857 = vmatpush.msra.mxu0 0.0
        %858 = vmatpush.msra.mxu0 0.0
        %859 = vmatpush.msra.mxu0 %v235
        %860 = vmatpush.msra.mxu0 %v234
        %861 = vmatmul.f32.gmra.mxu0 %v840
        %v862 = vpop.f32.mrf.mxu0
        %v863 = vadd.f32 0.0, %v862
        %864 = vmatmul.f32.gmra.mxu0 %v843
        %v865 = vpop.f32.mrf.mxu0
        %v866 = vadd.f32 0.0, %v865
        %867 = vdwg.mxu0
        %868 = vmatpush.msra.mxu0 0.0
        %869 = vmatpush.msra.mxu0 0.0
        %870 = vmatpush.msra.mxu0 0.0
        %871 = vmatpush.msra.mxu0 0.0
        %872 = vmatpush.msra.mxu0 0.0
        %873 = vmatpush.msra.mxu0 0.0
        %874 = vmatpush.msra.mxu0 0.0
        %875 = vmatpush.msra.mxu0 0.0
        %876 = vmatpush.msra.mxu0 0.0
        %877 = vmatpush.msra.mxu0 0.0
        %878 = vmatpush.msra.mxu0 0.0
        %879 = vmatpush.msra.mxu0 0.0
        %880 = vmatpush.msra.mxu0 0.0
        %881 = vmatpush.msra.mxu0 0.0
        %882 = vmatpush.msra.mxu0 %v866
        %883 = vmatpush.msra.mxu0 %v863
        %884 = vmatmul.f32.gmra.mxu0 %v269
        %v885 = vpop.f32.mrf.mxu0
        %v886 = vadd.f32 0.0, %v885
        %887 = vmatmul.f32.gmra.mxu0 %v272
        %v888 = vpop.f32.mrf.mxu0
        %v889 = vadd.f32 0.0, %v888
        %890 = vmatmul.f32.gmra.mxu0 %v275
        %v891 = vpop.f32.mrf.mxu0
        %v892 = vadd.f32 0.0, %v891
        %893 = vmatmul.f32.gmra.mxu0 %v278
        %v894 = vpop.f32.mrf.mxu0
        %v895 = vadd.f32 0.0, %v894
        %896 = vdwg.mxu0
        %v897 = vpack.c.bf16 %v886, %v886
        %v898 = vpack.c.bf16 %v889, %v889
        %v899 = vpack.c.bf16 %v892, %v892
        %v900 = vpack.c.bf16 %v895, %v895
        %v902 = vrot.slane %v897, 2
        %v905 = vsel %vm321, %v897, %v902
        %v907 = vrot.slane %v905, 7
        %vm909 = vcmask 1041409
        %vm910 = vsmask.f32 1280
        %vm911 = vmand %vm909, %vm910
        %v912 = vld [vmem:[%s229] sm:$0x2]
        %v913 = vsel %vm911, %v907, %v912
        %914 = vst [vmem:[%s229] sm:$0x2] %v913
        %v915 = vshrl.u32 %v905, 16
        %v917 = vrot.slane %v915, 7
        %v919 = vld [vmem:[%s229 + $0x2] sm:$0x2]
        %v920 = vsel %vm911, %v917, %v919
        %921 = vst [vmem:[%s229 + $0x2] sm:$0x2] %v920
        %v922 = vld [vmem:[%s229 + $0x4] sm:$0x2]
        %v923 = vsel %vm911, %v897, %v922
        %924 = vst [vmem:[%s229 + $0x4] sm:$0x2] %v923
        %v925 = vrot.slane %v915, 6
        %v926 = vrot.slane %v925, 2
        %v928 = vld [vmem:[%s229 + $0x6] sm:$0x2]
        %v929 = vsel %vm911, %v926, %v928
        %930 = vst [vmem:[%s229 + $0x6] sm:$0x2] %v929
        %931 = vst.sshfl [vmem:[#allocation1] sm:$0xff pattern:$0x75643120] %v897
        %s932 = scalar_lea.vmem [#allocation1], 1
        %v933 = vld [vmem:[%s932] ss:$2 sm:$0xff]
        %v935 = vrot.slane %v933, 7
        %v937 = vld [vmem:[%s229 + $0x8] sm:$0x2]
        %v938 = vsel %vm911, %v935, %v937
        %939 = vst [vmem:[%s229 + $0x8] sm:$0x2] %v938
        %940 = vst.sshfl [vmem:[#allocation1] sm:$0xff pattern:$0x75643120] %v897
        %s941 = scalar_lea.vmem [#allocation1], 1
        %v942 = vld [vmem:[%s941] ss:$2 sm:$0xff]
        %v943 = vshrl.u32 %v942, 16
        %v945 = vrot.slane %v943, 7
        %v947 = vld [vmem:[%s229 + $0xa] sm:$0x2]
        %v948 = vsel %vm911, %v945, %v947
        %949 = vst [vmem:[%s229 + $0xa] sm:$0x2] %v948
        %950 = vst.sshfl [vmem:[#allocation1] sm:$0xff pattern:$0x75643120] %v897
        %s951 = scalar_lea.vmem [#allocation1], 1
        %v952 = vld [vmem:[%s951] ss:$2 sm:$0xff]
        %v954 = vld [vmem:[%s229 + $0xc] sm:$0x2]
        %v955 = vsel %vm911, %v952, %v954
        %956 = vst [vmem:[%s229 + $0xc] sm:$0x2] %v955
        %957 = vst.sshfl [vmem:[#allocation1] sm:$0xff pattern:$0x75643120] %v897
        %s958 = scalar_lea.vmem [#allocation1], 1
        %v959 = vld [vmem:[%s958] ss:$2 sm:$0xff]
        %v960 = vshrl.u32 %v959, 16
        %v962 = vrot.slane %v960, 6
        %v963 = vrot.slane %v962, 2
        %v965 = vld [vmem:[%s229 + $0xe] sm:$0x2]
        %v966 = vsel %vm911, %v963, %v965
        %967 = vst [vmem:[%s229 + $0xe] sm:$0x2] %v966
        %v969 = vrot.slane %v898, 2
        %v972 = vsel %vm321, %v898, %v969
        %v974 = vrot.slane %v972, 7
        %v976 = vld [vmem:[%s229 + $0x10] sm:$0x2]
        %v977 = vsel %vm911, %v974, %v976
        %978 = vst [vmem:[%s229 + $0x10] sm:$0x2] %v977
        %v979 = vshrl.u32 %v972, 16
        %v981 = vrot.slane %v979, 7
        %v983 = vld [vmem:[%s229 + $0x12] sm:$0x2]
        %v984 = vsel %vm911, %v981, %v983
        %985 = vst [vmem:[%s229 + $0x12] sm:$0x2] %v984
        %v986 = vld [vmem:[%s229 + $0x14] sm:$0x2]
        %v987 = vsel %vm911, %v898, %v986
        %988 = vst [vmem:[%s229 + $0x14] sm:$0x2] %v987
        %v989 = vrot.slane %v979, 6
        %v990 = vrot.slane %v989, 2
        %v992 = vld [vmem:[%s229 + $0x16] sm:$0x2]
        %v993 = vsel %vm911, %v990, %v992
        %994 = vst [vmem:[%s229 + $0x16] sm:$0x2] %v993
        %995 = vst.sshfl [vmem:[#allocation1] sm:$0xff pattern:$0x75643120] %v898
        %s996 = scalar_lea.vmem [#allocation1], 1
        %v997 = vld [vmem:[%s996] ss:$2 sm:$0xff]
        %v999 = vrot.slane %v997, 7
        %v1001 = vld [vmem:[%s229 + $0x18] sm:$0x2]
        %v1002 = vsel %vm911, %v999, %v1001
        %1003 = vst [vmem:[%s229 + $0x18] sm:$0x2] %v1002
        %1004 = vst.sshfl [vmem:[#allocation1] sm:$0xff pattern:$0x75643120] %v898
        %s1005 = scalar_lea.vmem [#allocation1], 1
        %v1006 = vld [vmem:[%s1005] ss:$2 sm:$0xff]
        %v1007 = vshrl.u32 %v1006, 16
        %v1009 = vrot.slane %v1007, 7
        %v1011 = vld [vmem:[%s229 + $0x1a] sm:$0x2]
        %v1012 = vsel %vm911, %v1009, %v1011
        %1013 = vst [vmem:[%s229 + $0x1a] sm:$0x2] %v1012
        %1014 = vst.sshfl [vmem:[#allocation1] sm:$0xff pattern:$0x75643120] %v898
        %s1015 = scalar_lea.vmem [#allocation1], 1
        %v1016 = vld [vmem:[%s1015] ss:$2 sm:$0xff]
        %v1018 = vld [vmem:[%s229 + $0x1c] sm:$0x2]
        %v1019 = vsel %vm911, %v1016, %v1018
        %1020 = vst [vmem:[%s229 + $0x1c] sm:$0x2] %v1019
        %1021 = vst.sshfl [vmem:[#allocation1] sm:$0xff pattern:$0x75643120] %v898
        %s1022 = scalar_lea.vmem [#allocation1], 1
        %v1023 = vld [vmem:[%s1022] ss:$2 sm:$0xff]
        %v1024 = vshrl.u32 %v1023, 16
        %v1026 = vrot.slane %v1024, 6
        %v1027 = vrot.slane %v1026, 2
        %v1029 = vld [vmem:[%s229 + $0x1e] sm:$0x2]
        %v1030 = vsel %vm911, %v1027, %v1029
        %1031 = vst [vmem:[%s229 + $0x1e] sm:$0x2] %v1030
        %v1033 = vrot.slane %v899, 2
        %v1036 = vsel %vm321, %v899, %v1033
        %v1038 = vrot.slane %v1036, 7
        %v1040 = vld [vmem:[%s229 + $0x20] sm:$0x2]
        %v1041 = vsel %vm911, %v1038, %v1040
        %1042 = vst [vmem:[%s229 + $0x20] sm:$0x2] %v1041
        %v1043 = vshrl.u32 %v1036, 16
        %v1045 = vrot.slane %v1043, 7
        %v1047 = vld [vmem:[%s229 + $0x22] sm:$0x2]
        %v1048 = vsel %vm911, %v1045, %v1047
        %1049 = vst [vmem:[%s229 + $0x22] sm:$0x2] %v1048
        %v1050 = vld [vmem:[%s229 + $0x24] sm:$0x2]
        %v1051 = vsel %vm911, %v899, %v1050
        %1052 = vst [vmem:[%s229 + $0x24] sm:$0x2] %v1051
        %v1053 = vrot.slane %v1043, 6
        %v1054 = vrot.slane %v1053, 2
        %v1056 = vld [vmem:[%s229 + $0x26] sm:$0x2]
        %v1057 = vsel %vm911, %v1054, %v1056
        %1058 = vst [vmem:[%s229 + $0x26] sm:$0x2] %v1057
        %1059 = vst.sshfl [vmem:[#allocation1] sm:$0xff pattern:$0x75643120] %v899
        %s1060 = scalar_lea.vmem [#allocation1], 1
        %v1061 = vld [vmem:[%s1060] ss:$2 sm:$0xff]
        %v1063 = vrot.slane %v1061, 7
        %v1065 = vld [vmem:[%s229 + $0x28] sm:$0x2]
        %v1066 = vsel %vm911, %v1063, %v1065
        %1067 = vst [vmem:[%s229 + $0x28] sm:$0x2] %v1066
        %1068 = vst.sshfl [vmem:[#allocation1] sm:$0xff pattern:$0x75643120] %v899
        %s1069 = scalar_lea.vmem [#allocation1], 1
        %v1070 = vld [vmem:[%s1069] ss:$2 sm:$0xff]
        %v1071 = vshrl.u32 %v1070, 16
        %v1073 = vrot.slane %v1071, 7
        %v1075 = vld [vmem:[%s229 + $0x2a] sm:$0x2]
        %v1076 = vsel %vm911, %v1073, %v1075
        %1077 = vst [vmem:[%s229 + $0x2a] sm:$0x2] %v1076
        %1078 = vst.sshfl [vmem:[#allocation1] sm:$0xff pattern:$0x75643120] %v899
        %s1079 = scalar_lea.vmem [#allocation1], 1
        %v1080 = vld [vmem:[%s1079] ss:$2 sm:$0xff]
        %v1082 = vld [vmem:[%s229 + $0x2c] sm:$0x2]
        %v1083 = vsel %vm911, %v1080, %v1082
        %1084 = vst [vmem:[%s229 + $0x2c] sm:$0x2] %v1083
        %1085 = vst.sshfl [vmem:[#allocation1] sm:$0xff pattern:$0x75643120] %v899
        %s1086 = scalar_lea.vmem [#allocation1], 1
        %v1087 = vld [vmem:[%s1086] ss:$2 sm:$0xff]
        %v1088 = vshrl.u32 %v1087, 16
        %v1090 = vrot.slane %v1088, 6
        %v1091 = vrot.slane %v1090, 2
        %v1093 = vld [vmem:[%s229 + $0x2e] sm:$0x2]
        %v1094 = vsel %vm911, %v1091, %v1093
        %1095 = vst [vmem:[%s229 + $0x2e] sm:$0x2] %v1094
        %v1097 = vrot.slane %v900, 2
        %v1100 = vsel %vm321, %v900, %v1097
        %v1102 = vrot.slane %v1100, 7
        %v1104 = vld [vmem:[%s229 + $0x30] sm:$0x2]
        %v1105 = vsel %vm911, %v1102, %v1104
        %1106 = vst [vmem:[%s229 + $0x30] sm:$0x2] %v1105
        %v1107 = vshrl.u32 %v1100, 16
        %v1109 = vrot.slane %v1107, 7
        %v1111 = vld [vmem:[%s229 + $0x32] sm:$0x2]
        %v1112 = vsel %vm911, %v1109, %v1111
        %1113 = vst [vmem:[%s229 + $0x32] sm:$0x2] %v1112
        %v1114 = vld [vmem:[%s229 + $0x34] sm:$0x2]
        %v1115 = vsel %vm911, %v900, %v1114
        %1116 = vst [vmem:[%s229 + $0x34] sm:$0x2] %v1115
        %v1117 = vrot.slane %v1107, 6
        %v1118 = vrot.slane %v1117, 2
        %v1120 = vld [vmem:[%s229 + $0x36] sm:$0x2]
        %v1121 = vsel %vm911, %v1118, %v1120
        %1122 = vst [vmem:[%s229 + $0x36] sm:$0x2] %v1121
        %p1123 = scmp.lt.s32.totalorder %s19, 1
        %s1124 = scalar_select %p1123, %s19, 1
        %p1125 = scmp.lt.s32.totalorder %s20, 1
        %s1126 = scalar_select %p1125, %s20, 1
        %s1127 = smul.addr %s1126, 28
        %s1128 = smul.addr %s1124, 56
        %s1129 = sadd.s32 %s1127, %s1128
        %s1130 = smul.addr %s1129, 2
        %s1131 = scalar_lea.vmem %s3, %s1130
        // Predicated region
        $region37: #{tpu_custom_call.1} parent=31 // pred_check
          %p1132 = pneg %p120
        $region38: #{tpu_custom_call.1} parent=31 // pred_check_branch
          %1134 = sbr.rel (%p1132) target = $region40
        $region39: #{tpu_custom_call.1} parent=31 // pred_region
          _
        $region40: #{tpu_custom_call.1} parent=31 // pred_fallthru
          _
      $region32: #{tpu_custom_call.1} parent=5 // pred_fallthru
        _
      %p1135 = scmp.le.s32.totalorder 2, %s10
      // Predicated region
      $region41: #{tpu_custom_call.1} parent=5 // pred_check
        %p1136 = pneg %p1135
      $region42: #{tpu_custom_call.1} parent=5 // pred_check_branch
        %1138 = sbr.rel (%p1136) target = $region44
      $region43: #{tpu_custom_call.1} parent=5 // pred_region
        %s1139 = ssub.s32 %s10, 2
        // Predicated region
        $region45: #{tpu_custom_call.1} parent=43 // pred_check
          %p1140 = pneg %p126
        $region46: #{tpu_custom_call.1} parent=43 // pred_check_branch
          %1142 = sbr.rel (%p1140) target = $region48
        $region47: #{tpu_custom_call.1} parent=43 // pred_region
          %p1143 = scmp.lt.s32.totalorder %s21, 1
          %s1144 = scalar_select %p1143, %s21, 1
          %p1145 = scmp.lt.s32.totalorder %s22, 1
          %s1146 = scalar_select %p1145, %s22, 1
          %s1147 = smul.addr %s1146, 28
          %s1148 = smul.addr %s1144, 56
          %s1149 = sadd.s32 %s1147, %s1148
          %s1150 = smul.addr %s1149, 2
          %s1151 = scalar_lea.vmem %s3, %s1150
        $region48: #{tpu_custom_call.1} parent=43 // pred_fallthru
          _
      $region44: #{tpu_custom_call.1} parent=5 // pred_fallthru
        _
    $region6: #{tpu_custom_call.1} parent=1 // loop_footer
      %s14 = sadd.s32 1, %s10
    $region7: #{tpu_custom_call.1} parent=1 // loop_footer_branch
      %9 = sbr.rel target = $region3
    $region8: #{tpu_custom_call.1} parent=1 // loop_exit
      _
    %1152 = vsyncpa [#allocation3], 1
    %s1153 = scalar_lea.sflag [#allocation3], 1
    %1154 = vsyncpa %s1153, 1

</llo_original>
